<compile_context>
chip_gen: v5e
topology: v5e:2x2
jax: 0.10.0
libtpu: 0.0.40
codegen_flags: <defaults>
</compile_context>

<pallas_src>
import functools

import jax
import jax.numpy as jnp
from jax.experimental import pallas as pl
from jax.experimental.pallas import tpu as pltpu


def _round_up(x, m):
    return (x + m - 1) // m * m


# ---------------------------------------------------------------------------
# Fused stride-1 conv kernel: on-the-fly im2col + single MXU matmul + bias (+ReLU).
#   x_ref     : (Cin_p, sp_pad)      whole padded, flattened image of batch b (VMEM)
#   w_ref     : (Cout_p, T*Cin_p)    im2col-concatenated weight matrix (resident)
#   b_ref     : (Cout_p, 1)          bias
#   o_ref     : (Cout_p, tm)         output tile: channels on sublanes, spatial on lanes
#   patch_ref : (T*Cin_p, tm)        VMEM scratch holding the gathered patch
# ---------------------------------------------------------------------------
def _conv_gemm_kernel(x_ref, w_ref, b_ref, o_ref, patch_ref, *, tap_offsets,
                      cin_p, tm, tm_ext, m_tiles, apply_relu):
    if m_tiles == 1:
        start = 0                                    # fully static path
    else:
        start = pl.multiple_of(pl.program_id(1) * tm, 128)
    blk = x_ref[:, pl.ds(start, tm_ext)]             # (Cin_p, tm_ext)

    # On-the-fly im2col: each tap is a static lane-shifted slice of the block,
    # stacked along sublanes into the VMEM scratch (all rows overwritten each step).
    for t, off in enumerate(tap_offsets):            # static unroll (<= 9 taps)
        patch_ref[pl.ds(t * cin_p, cin_p), :] = blk[:, off:off + tm]

    acc = jnp.dot(w_ref[...], patch_ref[...],        # one MXU matmul per tile
                  preferred_element_type=jnp.float32)
    acc += b_ref[...].astype(jnp.float32)            # (Cout_p,1) broadcast over lanes
    if apply_relu:
        acc = jnp.maximum(acc, 0.0)
    o_ref[...] = acc.astype(o_ref.dtype)


def conv2d_taps(x, w_tap, bias, Kh, Kw, pad_h, pad_w, apply_relu,
                compute_dtype=jnp.float32, tm_cap=512):
    """Stride-1 conv, channels-first: (B,Cin,H,W) -> (B,Cout,Ho,Wo).

    w_tap: (Kh*Kw, Cout, Cin), tap t = ky*Kw + kx.
    out[b,co,y,x] = relu?( bias[co] + sum_{t,ci} w_tap[t,co,ci]*xpad[b,ci,y+ky,x+kx] ).
    """
    B, Cin, H, W = x.shape
    T, Cout, Cin_w = w_tap.shape
    assert T == Kh * Kw and Cin_w == Cin
    Hp, Wp = H + 2 * pad_h, W + 2 * pad_w
    Ho, Wo = Hp - Kh + 1, Wp - Kw + 1

    itemsize = jnp.dtype(compute_dtype).itemsize
    cin_align = 8 * (4 // itemsize)                  # 8 for f32, 16 for bf16
    Cin_p = _round_up(Cin, cin_align)
    Cout_p = _round_up(Cout, 8)

    # Compute the output at padded width Wp (last Wp-Wo cols of each row are garbage
    # and sliced off below) so every tap is a constant flat-offset lane shift.
    M = Ho * Wp
    tm = min(tm_cap, _round_up(M, 128))
    m_tiles = pl.cdiv(M, tm)
    M_pad = m_tiles * tm
    max_off = (Kh - 1) * Wp + (Kw - 1)
    halo = _round_up(max_off, 128)
    tm_ext = tm + halo
    sp_pad = M_pad + halo

    # Channel pad + spatial pad + flatten (+ zero tail for halo reads).
    xp = jnp.pad(x, ((0, 0), (0, Cin_p - Cin), (pad_h, pad_h), (pad_w, pad_w)))
    x_flat = jnp.pad(xp.reshape(B, Cin_p, Hp * Wp),
                     ((0, 0), (0, 0), (0, sp_pad - Hp * Wp))).astype(compute_dtype)
    # TODO(synk): this spatial jnp.pad (and the valid-column slice below) are still
    # wrapper-side HBM copies; they could be folded into the kernel via masked loads.

    # Pre-concatenated im2col weight: row co, column t*Cin_p + ci = w_tap[t, co, ci].
    w_p = jnp.zeros((T, Cout_p, Cin_p), compute_dtype)
    w_p = w_p.at[:, :Cout, :Cin].set(w_tap.astype(compute_dtype))
    w_cat = jnp.transpose(w_p, (1, 0, 2)).reshape(Cout_p, T * Cin_p)
    b_p = jnp.zeros((Cout_p, 1), jnp.float32).at[:Cout, 0].set(bias.astype(jnp.float32))

    tap_offsets = tuple(ky * Wp + kx for ky in range(Kh) for kx in range(Kw))

    cost = pl.CostEstimate(
        flops=2 * B * M_pad * Cout_p * T * Cin_p,
        transcendentals=0,
        bytes_accessed=(B * Cin_p * sp_pad * itemsize + Cout_p * T * Cin_p * itemsize
                        + Cout_p * 4 + B * Cout_p * M_pad * 4))

    kernel = functools.partial(_conv_gemm_kernel, tap_offsets=tap_offsets,
                               cin_p=Cin_p, tm=tm, tm_ext=tm_ext,
                               m_tiles=m_tiles, apply_relu=apply_relu)

    out_flat = pl.pallas_call(
        kernel,
        out_shape=jax.ShapeDtypeStruct((B, Cout_p, M_pad), jnp.float32),
        grid_spec=pltpu.PrefetchScalarGridSpec(
            num_scalar_prefetch=0,
            grid=(B, m_tiles),
            in_specs=[
                pl.BlockSpec((None, Cin_p, sp_pad), lambda b, j: (b, 0, 0)),
                pl.BlockSpec((Cout_p, T * Cin_p), lambda b, j: (0, 0)),
                pl.BlockSpec((Cout_p, 1), lambda b, j: (0, 0)),
            ],
            out_specs=pl.BlockSpec((None, Cout_p, tm), lambda b, j: (b, 0, j)),
            scratch_shapes=[pltpu.VMEM((T * Cin_p, tm), compute_dtype)],
        ),
        compiler_params=pltpu.CompilerParams(
            dimension_semantics=("parallel", "parallel"),
            vmem_limit_bytes=64 * 1024 * 1024),
        cost_estimate=cost,
    )(x_flat, w_cat, b_p)

    return out_flat[:, :Cout, :M].reshape(B, Cout, Ho, Wp)[:, :, :, :Wo]


# ---------------------------------------------------------------------------
# Layer wrappers.
# ---------------------------------------------------------------------------
def deconv5x5_s2(x, w_t, bias, apply_relu, compute_dtype=jnp.float32):
    """ConvTranspose2d(Cin, Cout, 5, stride=2, padding=2, output_padding=1) (+ReLU).

    Lowered to a single stride-1 3x3 'super-kernel' conv on the UN-dilated input
    producing all 4 output-parity classes as 4*Cout channels, then a pixel-shuffle.
    """
    B, Cin, H, W = x.shape
    Cin_w, Cout, K, _ = w_t.shape
    assert Cin_w == Cin and K == 5
    # conv-equivalent (spatially flipped, channel-transposed) kernel
    wf = jnp.flip(w_t, axis=(2, 3)).transpose(1, 0, 2, 3)          # (Cout, Cin, 5, 5)

    taps = []
    for ty in range(3):
        for tx in range(3):
            blocks = []
            for py in range(2):
                for px in range(2):
                    a = 2 * ty if py == 0 else 2 * ty - 1
                    c = 2 * tx if px == 0 else 2 * tx - 1
                    if 0 <= a < K and 0 <= c < K:
                        blocks.append(wf[:, :, a, c])               # (Cout, Cin)
                    else:
                        blocks.append(jnp.zeros((Cout, Cin), wf.dtype))
            taps.append(jnp.concatenate(blocks, axis=0))            # (4*Cout, Cin)
    w_sup = jnp.stack(taps, axis=0)                                 # (9, 4*Cout, Cin)
    b_sup = jnp.tile(bias, 4)                                       # (4*Cout,)

    y = conv2d_taps(x, w_sup, b_sup, 3, 3, 1, 1, apply_relu, compute_dtype)
    # y: (B, 4*Cout, H, W); class c = 2*py+px occupies channels [c*Cout,(c+1)*Cout)
    # TODO(synk): the pixel-shuffle below is a wrapper-side HBM transpose; it could
    # be folded into the kernel's output BlockSpec with an interleaved store layout.
    y = y.reshape(B, 2, 2, Cout, H, W).transpose(0, 3, 4, 1, 5, 2)  # (B,co,u,py,v,px)
    return y.reshape(B, Cout, 2 * H, 2 * W)


def conv3x3_s1(x, w, bias, apply_relu, compute_dtype=jnp.float32):
    """Conv2d(Cin, Cout, 3, stride=1, padding=1) (+ optional ReLU)."""
    Cout, Cin, K, _ = w.shape
    w_tap = jnp.transpose(w, (2, 3, 0, 1)).reshape(K * K, Cout, Cin)
    return conv2d_taps(x, w_tap, bias, K, K, 1, 1, apply_relu, compute_dtype)


# ---------------------------------------------------------------------------
# ResiDecoder parameters + forward (NCHW in / NCHW out, like the PyTorch module).
# ---------------------------------------------------------------------------
def init_params(key, N=8):
    """Deterministic synthetic weights with the exact PyTorch shapes."""
    Nh = N * 3 // 2
    ks = jax.random.split(key, 6)

    def w_init(k, shape):
        fan_in = shape[1] * shape[2] * shape[3]
        return jax.random.normal(k, shape, jnp.float32) / jnp.sqrt(float(fan_in))

    return {
        # ConvTranspose2d weights are (Cin, Cout, K, K)
        "w1": w_init(ks[0], (N, N, 5, 5)),
        "b1": 0.1 * jax.random.normal(ks[1], (N,), jnp.float32),
        "w2": w_init(ks[2], (N, Nh, 5, 5)),
        "b2": 0.1 * jax.random.normal(ks[3], (Nh,), jnp.float32),
        # Conv2d weight is (Cout, Cin, K, K)
        "w3": w_init(ks[4], (N, Nh, 3, 3)),
        "b3": 0.1 * jax.random.normal(ks[5], (N,), jnp.float32),
    }


def resi_decoder_forward(z_hat_nchw, params, compute_dtype=jnp.float32):
    # h_s: deconv(N,N,k5,s2) -> ReLU -> deconv(N,3N/2,k5,s2) -> ReLU -> conv3x3(3N/2,N)
    x = deconv5x5_s2(z_hat_nchw, params["w1"], params["b1"], True, compute_dtype)
    x = deconv5x5_s2(x, params["w2"], params["b2"], True, compute_dtype)
    x = conv3x3_s1(x, params["w3"], params["b3"], False, compute_dtype)
    return x


# ---------------------------------------------------------------------------
# XLA reference (sanity check only).
# ---------------------------------------------------------------------------
def _ref_forward(z_hat, params):
    dn = ("NCHW", "OIHW", "NCHW")
    hp = jax.lax.Precision.HIGHEST

    def convT(x, w, b, s, p, op):
        K = w.shape[-1]
        wc = jnp.flip(w, (2, 3)).transpose(1, 0, 2, 3)
        y = jax.lax.conv_general_dilated(
            x, wc, (1, 1), [(K - 1 - p, K - 1 - p + op)] * 2,
            lhs_dilation=(s, s), dimension_numbers=dn, precision=hp)
        return y + b[None, :, None, None]

    def conv(x, w, b, p):
        y = jax.lax.conv_general_dilated(
            x, w, (1, 1), [(p, p)] * 2, dimension_numbers=dn, precision=hp)
        return y + b[None, :, None, None]

    x = jax.nn.relu(convT(z_hat, params["w1"], params["b1"], 2, 2, 1))
    x = jax.nn.relu(convT(x, params["w2"], params["b2"], 2, 2, 1))
    return conv(x, params["w3"], params["b3"], 1)


if __name__ == "__main__":
    # Small synthetic config consistent with the module (N must be even; M unused).
    N, B, H, W = 8, 2, 4, 4
    key = jax.random.PRNGKey(0)
    kx, kp = jax.random.split(key)
    z_hat = jax.random.normal(kx, (B, N, H, W), jnp.float32)
    params = init_params(kp, N=N)

    ref = _ref_forward(z_hat, params)

    # f32 operand path (v5e-friendly default).
    fwd_f32 = jax.jit(functools.partial(resi_decoder_forward, compute_dtype=jnp.float32))
    out = jax.block_until_ready(fwd_f32(z_hat, params))
    assert out.shape == (B, N, 4 * H, 4 * W), out.shape
    err = float(jnp.max(jnp.abs(out - ref)) / (jnp.max(jnp.abs(ref)) + 1e-6))
    assert err < 1e-2, f"f32 mismatch vs XLA reference: rel err {err}"

    # bf16 MXU-operand path (recommended on v6e/v7x); f32 accumulation in-kernel.
    fwd_bf16 = jax.jit(functools.partial(resi_decoder_forward, compute_dtype=jnp.bfloat16))
    out_bf16 = jax.block_until_ready(fwd_bf16(z_hat, params))
    err_bf16 = float(jnp.max(jnp.abs(out_bf16 - ref)) / (jnp.max(jnp.abs(ref)) + 1e-6))
    assert err_bf16 < 5e-2, f"bf16 mismatch vs XLA reference: rel err {err_bf16}"

    print("KERNEL_OK")
</pallas_src>

<mosaic_0001>
module attributes {stable_mosaic.version = 11 : i64} {
  func.func @_conv_gemm_kernel(%arg0: i32, %arg1: i32, %arg2: memref<1x8x256xf32, #tpu.memory_space<vmem>>, %arg3: memref<32x72xf32, #tpu.memory_space<vmem>>, %arg4: memref<32x1xf32, #tpu.memory_space<vmem>>, %arg5: memref<1x32x128xf32, #tpu.memory_space<vmem>>, %arg6: memref<72x128xf32, #tpu.memory_space<vmem>>) attributes {dimension_semantics = [#tpu.dimension_semantics<parallel>, #tpu.dimension_semantics<parallel>], iteration_bounds = array<i64: 2, 1>, scalar_prefetch = 0 : i64, scratch_operands = 1 : i64, tpu.core_type = #tpu.core_type<tc>, window_params = [{transform_indices = @transform_0, window_bounds = array<i64: 1, 8, 256>}, {pipeline_mode = #tpu.pipeline_mode<synchronous>, transform_indices = @transform_1, window_bounds = array<i64: 32, 72>}, {pipeline_mode = #tpu.pipeline_mode<synchronous>, transform_indices = @transform_2, window_bounds = array<i64: 32, 1>}, {transform_indices = @transform_3, window_bounds = array<i64: 1, 32, 128>}]} {
    %c0 = arith.constant 0 : index
    %c0_0 = arith.constant 0 : index
    %c0_1 = arith.constant 0 : index
    %0 = vector.load %arg2[%c0, %c0_0, %c0_1] : memref<1x8x256xf32, #tpu.memory_space<vmem>>, vector<1x8x256xf32>
    %1 = vector.shape_cast %0 : vector<1x8x256xf32> to vector<8x256xf32>
    %2 = vector.extract_strided_slice %1 {offsets = [0, 0], sizes = [8, 128], strides = [1, 1]} : vector<8x256xf32> to vector<8x128xf32>
    %c0_2 = arith.constant 0 : index
    %c0_3 = arith.constant 0 : index
    %3 = vector.load %arg6[%c0_2, %c0_3] : memref<72x128xf32, #tpu.memory_space<vmem>>, vector<8x128xf32>
    tpu.vector_store %arg6[%c0_2, %c0_3], %2 {strides = array<i32>} : memref<72x128xf32, #tpu.memory_space<vmem>>, vector<8x128xf32>,
    %4 = vector.extract_strided_slice %1 {offsets = [0, 1], sizes = [8, 128], strides = [1, 1]} : vector<8x256xf32> to vector<8x128xf32>
    %c8 = arith.constant 8 : index
    %c0_4 = arith.constant 0 : index
    %5 = vector.load %arg6[%c8, %c0_4] : memref<72x128xf32, #tpu.memory_space<vmem>>, vector<8x128xf32>
    tpu.vector_store %arg6[%c8, %c0_4], %4 {strides = array<i32>} : memref<72x128xf32, #tpu.memory_space<vmem>>, vector<8x128xf32>,
    %6 = vector.extract_strided_slice %1 {offsets = [0, 2], sizes = [8, 128], strides = [1, 1]} : vector<8x256xf32> to vector<8x128xf32>
    %c16 = arith.constant 16 : index
    %c0_5 = arith.constant 0 : index
    %7 = vector.load %arg6[%c16, %c0_5] : memref<72x128xf32, #tpu.memory_space<vmem>>, vector<8x128xf32>
    tpu.vector_store %arg6[%c16, %c0_5], %6 {strides = array<i32>} : memref<72x128xf32, #tpu.memory_space<vmem>>, vector<8x128xf32>,
    %8 = vector.extract_strided_slice %1 {offsets = [0, 6], sizes = [8, 128], strides = [1, 1]} : vector<8x256xf32> to vector<8x128xf32>
    %c24 = arith.constant 24 : index
    %c0_6 = arith.constant 0 : index
    %9 = vector.load %arg6[%c24, %c0_6] : memref<72x128xf32, #tpu.memory_space<vmem>>, vector<8x128xf32>
    tpu.vector_store %arg6[%c24, %c0_6], %8 {strides = array<i32>} : memref<72x128xf32, #tpu.memory_space<vmem>>, vector<8x128xf32>,
    %10 = vector.extract_strided_slice %1 {offsets = [0, 7], sizes = [8, 128], strides = [1, 1]} : vector<8x256xf32> to vector<8x128xf32>
    %c32 = arith.constant 32 : index
    %c0_7 = arith.constant 0 : index
    %11 = vector.load %arg6[%c32, %c0_7] : memref<72x128xf32, #tpu.memory_space<vmem>>, vector<8x128xf32>
    tpu.vector_store %arg6[%c32, %c0_7], %10 {strides = array<i32>} : memref<72x128xf32, #tpu.memory_space<vmem>>, vector<8x128xf32>,
    %12 = vector.extract_strided_slice %1 {offsets = [0, 8], sizes = [8, 128], strides = [1, 1]} : vector<8x256xf32> to vector<8x128xf32>
    %c40 = arith.constant 40 : index
    %c0_8 = arith.constant 0 : index
    %13 = vector.load %arg6[%c40, %c0_8] : memref<72x128xf32, #tpu.memory_space<vmem>>, vector<8x128xf32>
    tpu.vector_store %arg6[%c40, %c0_8], %12 {strides = array<i32>} : memref<72x128xf32, #tpu.memory_space<vmem>>, vector<8x128xf32>,
    %14 = vector.extract_strided_slice %1 {offsets = [0, 12], sizes = [8, 128], strides = [1, 1]} : vector<8x256xf32> to vector<8x128xf32>
    %c48 = arith.constant 48 : index
    %c0_9 = arith.constant 0 : index
    %15 = vector.load %arg6[%c48, %c0_9] : memref<72x128xf32, #tpu.memory_space<vmem>>, vector<8x128xf32>
    tpu.vector_store %arg6[%c48, %c0_9], %14 {strides = array<i32>} : memref<72x128xf32, #tpu.memory_space<vmem>>, vector<8x128xf32>,
    %16 = vector.extract_strided_slice %1 {offsets = [0, 13], sizes = [8, 128], strides = [1, 1]} : vector<8x256xf32> to vector<8x128xf32>
    %c56 = arith.constant 56 : index
    %c0_10 = arith.constant 0 : index
    %17 = vector.load %arg6[%c56, %c0_10] : memref<72x128xf32, #tpu.memory_space<vmem>>, vector<8x128xf32>
    tpu.vector_store %arg6[%c56, %c0_10], %16 {strides = array<i32>} : memref<72x128xf32, #tpu.memory_space<vmem>>, vector<8x128xf32>,
    %18 = vector.extract_strided_slice %1 {offsets = [0, 14], sizes = [8, 128], strides = [1, 1]} : vector<8x256xf32> to vector<8x128xf32>
    %c64 = arith.constant 64 : index
    %c0_11 = arith.constant 0 : index
    %19 = vector.load %arg6[%c64, %c0_11] : memref<72x128xf32, #tpu.memory_space<vmem>>, vector<8x128xf32>
    tpu.vector_store %arg6[%c64, %c0_11], %18 {strides = array<i32>} : memref<72x128xf32, #tpu.memory_space<vmem>>, vector<8x128xf32>,
    %c0_12 = arith.constant 0 : index
    %c0_13 = arith.constant 0 : index
    %20 = vector.load %arg3[%c0_12, %c0_13] : memref<32x72xf32, #tpu.memory_space<vmem>>, vector<32x72xf32>
    %c0_14 = arith.constant 0 : index
    %c0_15 = arith.constant 0 : index
    %21 = vector.load %arg6[%c0_14, %c0_15] : memref<72x128xf32, #tpu.memory_space<vmem>>, vector<72x128xf32>
    %cst = arith.constant dense<0.000000e+00> : vector<32x128xf32>
    %22 = tpu.matmul %20, %21, %cst {dimension_numbers = #tpu.dot_dimension_numbers<[1], [0], [0], [1], [0, 0, 1, 1], [], []>} : vector<32x72xf32>, vector<72x128xf32>, vector<32x128xf32> -> vector<32x128xf32>
    %c0_16 = arith.constant 0 : index
    %c0_17 = arith.constant 0 : index
    %23 = vector.load %arg4[%c0_16, %c0_17] : memref<32x1xf32, #tpu.memory_space<vmem>>, vector<32x1xf32>
    %24 = vector.broadcast %23 : vector<32x1xf32> to vector<32x128xf32>
    %25 = arith.addf %22, %24 : vector<32x128xf32>
    %cst_18 = arith.constant 0.000000e+00 : f32
    %26 = vector.broadcast %cst_18 : f32 to vector<32x128xf32>
    %27 = arith.maximumf %25, %26 : vector<32x128xf32>
    %c0_19 = arith.constant 0 : index
    %c0_20 = arith.constant 0 : index
    %c0_21 = arith.constant 0 : index
    %28 = vector.load %arg5[%c0_19, %c0_20, %c0_21] : memref<1x32x128xf32, #tpu.memory_space<vmem>>, vector<1x32x128xf32>
    %29 = vector.shape_cast %28 : vector<1x32x128xf32> to vector<32x128xf32>
    %30 = vector.shape_cast %27 : vector<32x128xf32> to vector<1x32x128xf32>
    tpu.vector_store %arg5[%c0_19, %c0_20, %c0_21], %30 {strides = array<i32>} : memref<1x32x128xf32, #tpu.memory_space<vmem>>, vector<1x32x128xf32>,
    return
  }
  func.func @transform_0(%arg0: i32, %arg1: i32) -> (i32, i32, i32) {
    %c0_i32 = arith.constant 0 : i32
    %c0_i32_0 = arith.constant 0 : i32
    %c0_i32_1 = arith.constant 0 : i32
    return %arg0, %c0_i32, %c0_i32_0 : i32, i32, i32
  }
  func.func @transform_1(%arg0: i32, %arg1: i32) -> (i32, i32) {
    %c0_i32 = arith.constant 0 : i32
    %c0_i32_0 = arith.constant 0 : i32
    %c0_i32_1 = arith.constant 0 : i32
    return %c0_i32, %c0_i32_0 : i32, i32
  }
  func.func @transform_2(%arg0: i32, %arg1: i32) -> (i32, i32) {
    %c0_i32 = arith.constant 0 : i32
    %c0_i32_0 = arith.constant 0 : i32
    %c0_i32_1 = arith.constant 0 : i32
    return %c0_i32, %c0_i32_0 : i32, i32
  }
  func.func @transform_3(%arg0: i32, %arg1: i32) -> (i32, i32, i32) {
    %c0_i32 = arith.constant 0 : i32
    %c0_i32_0 = arith.constant 0 : i32
    return %arg0, %c0_i32, %arg1 : i32, i32, i32
  }
}

module attributes {stable_mosaic.version = 11 : i64} {
  func.func @_conv_gemm_kernel(%arg0: i32, %arg1: i32, %arg2: memref<1x8x256xf32, #tpu.memory_space<vmem>>, %arg3: memref<48x72xf32, #tpu.memory_space<vmem>>, %arg4: memref<48x1xf32, #tpu.memory_space<vmem>>, %arg5: memref<1x48x128xf32, #tpu.memory_space<vmem>>, %arg6: memref<72x128xf32, #tpu.memory_space<vmem>>) attributes {dimension_semantics = [#tpu.dimension_semantics<parallel>, #tpu.dimension_semantics<parallel>], iteration_bounds = array<i64: 2, 1>, scalar_prefetch = 0 : i64, scratch_operands = 1 : i64, tpu.core_type = #tpu.core_type<tc>, window_params = [{transform_indices = @transform_0, window_bounds = array<i64: 1, 8, 256>}, {pipeline_mode = #tpu.pipeline_mode<synchronous>, transform_indices = @transform_1, window_bounds = array<i64: 48, 72>}, {pipeline_mode = #tpu.pipeline_mode<synchronous>, transform_indices = @transform_2, window_bounds = array<i64: 48, 1>}, {transform_indices = @transform_3, window_bounds = array<i64: 1, 48, 128>}]} {
    %c0 = arith.constant 0 : index
    %c0_0 = arith.constant 0 : index
    %c0_1 = arith.constant 0 : index
    %0 = vector.load %arg2[%c0, %c0_0, %c0_1] : memref<1x8x256xf32, #tpu.memory_space<vmem>>, vector<1x8x256xf32>
    %1 = vector.shape_cast %0 : vector<1x8x256xf32> to vector<8x256xf32>
    %2 = vector.extract_strided_slice %1 {offsets = [0, 0], sizes = [8, 128], strides = [1, 1]} : vector<8x256xf32> to vector<8x128xf32>
    %c0_2 = arith.constant 0 : index
    %c0_3 = arith.constant 0 : index
    %3 = vector.load %arg6[%c0_2, %c0_3] : memref<72x128xf32, #tpu.memory_space<vmem>>, vector<8x128xf32>
    tpu.vector_store %arg6[%c0_2, %c0_3], %2 {strides = array<i32>} : memref<72x128xf32, #tpu.memory_space<vmem>>, vector<8x128xf32>,
    %4 = vector.extract_strided_slice %1 {offsets = [0, 1], sizes = [8, 128], strides = [1, 1]} : vector<8x256xf32> to vector<8x128xf32>
    %c8 = arith.constant 8 : index
    %c0_4 = arith.constant 0 : index
    %5 = vector.load %arg6[%c8, %c0_4] : memref<72x128xf32, #tpu.memory_space<vmem>>, vector<8x128xf32>
    tpu.vector_store %arg6[%c8, %c0_4], %4 {strides = array<i32>} : memref<72x128xf32, #tpu.memory_space<vmem>>, vector<8x128xf32>,
    %6 = vector.extract_strided_slice %1 {offsets = [0, 2], sizes = [8, 128], strides = [1, 1]} : vector<8x256xf32> to vector<8x128xf32>
    %c16 = arith.constant 16 : index
    %c0_5 = arith.constant 0 : index
    %7 = vector.load %arg6[%c16, %c0_5] : memref<72x128xf32, #tpu.memory_space<vmem>>, vector<8x128xf32>
    tpu.vector_store %arg6[%c16, %c0_5], %6 {strides = array<i32>} : memref<72x128xf32, #tpu.memory_space<vmem>>, vector<8x128xf32>,
    %8 = vector.extract_strided_slice %1 {offsets = [0, 10], sizes = [8, 128], strides = [1, 1]} : vector<8x256xf32> to vector<8x128xf32>
    %c24 = arith.constant 24 : index
    %c0_6 = arith.constant 0 : index
    %9 = vector.load %arg6[%c24, %c0_6] : memref<72x128xf32, #tpu.memory_space<vmem>>, vector<8x128xf32>
    tpu.vector_store %arg6[%c24, %c0_6], %8 {strides = array<i32>} : memref<72x128xf32, #tpu.memory_space<vmem>>, vector<8x128xf32>,
    %10 = vector.extract_strided_slice %1 {offsets = [0, 11], sizes = [8, 128], strides = [1, 1]} : vector<8x256xf32> to vector<8x128xf32>
    %c32 = arith.constant 32 : index
    %c0_7 = arith.constant 0 : index
    %11 = vector.load %arg6[%c32, %c0_7] : memref<72x128xf32, #tpu.memory_space<vmem>>, vector<8x128xf32>
    tpu.vector_store %arg6[%c32, %c0_7], %10 {strides = array<i32>} : memref<72x128xf32, #tpu.memory_space<vmem>>, vector<8x128xf32>,
    %12 = vector.extract_strided_slice %1 {offsets = [0, 12], sizes = [8, 128], strides = [1, 1]} : vector<8x256xf32> to vector<8x128xf32>
    %c40 = arith.constant 40 : index
    %c0_8 = arith.constant 0 : index
    %13 = vector.load %arg6[%c40, %c0_8] : memref<72x128xf32, #tpu.memory_space<vmem>>, vector<8x128xf32>
    tpu.vector_store %arg6[%c40, %c0_8], %12 {strides = array<i32>} : memref<72x128xf32, #tpu.memory_space<vmem>>, vector<8x128xf32>,
    %14 = vector.extract_strided_slice %1 {offsets = [0, 20], sizes = [8, 128], strides = [1, 1]} : vector<8x256xf32> to vector<8x128xf32>
    %c48 = arith.constant 48 : index
    %c0_9 = arith.constant 0 : index
    %15 = vector.load %arg6[%c48, %c0_9] : memref<72x128xf32, #tpu.memory_space<vmem>>, vector<8x128xf32>
    tpu.vector_store %arg6[%c48, %c0_9], %14 {strides = array<i32>} : memref<72x128xf32, #tpu.memory_space<vmem>>, vector<8x128xf32>,
    %16 = vector.extract_strided_slice %1 {offsets = [0, 21], sizes = [8, 128], strides = [1, 1]} : vector<8x256xf32> to vector<8x128xf32>
    %c56 = arith.constant 56 : index
    %c0_10 = arith.constant 0 : index
    %17 = vector.load %arg6[%c56, %c0_10] : memref<72x128xf32, #tpu.memory_space<vmem>>, vector<8x128xf32>
    tpu.vector_store %arg6[%c56, %c0_10], %16 {strides = array<i32>} : memref<72x128xf32, #tpu.memory_space<vmem>>, vector<8x128xf32>,
    %18 = vector.extract_strided_slice %1 {offsets = [0, 22], sizes = [8, 128], strides = [1, 1]} : vector<8x256xf32> to vector<8x128xf32>
    %c64 = arith.constant 64 : index
    %c0_11 = arith.constant 0 : index
    %19 = vector.load %arg6[%c64, %c0_11] : memref<72x128xf32, #tpu.memory_space<vmem>>, vector<8x128xf32>
    tpu.vector_store %arg6[%c64, %c0_11], %18 {strides = array<i32>} : memref<72x128xf32, #tpu.memory_space<vmem>>, vector<8x128xf32>,
    %c0_12 = arith.constant 0 : index
    %c0_13 = arith.constant 0 : index
    %20 = vector.load %arg3[%c0_12, %c0_13] : memref<48x72xf32, #tpu.memory_space<vmem>>, vector<48x72xf32>
    %c0_14 = arith.constant 0 : index
    %c0_15 = arith.constant 0 : index
    %21 = vector.load %arg6[%c0_14, %c0_15] : memref<72x128xf32, #tpu.memory_space<vmem>>, vector<72x128xf32>
    %cst = arith.constant dense<0.000000e+00> : vector<48x128xf32>
    %22 = tpu.matmul %20, %21, %cst {dimension_numbers = #tpu.dot_dimension_numbers<[1], [0], [0], [1], [0, 0, 1, 1], [], []>} : vector<48x72xf32>, vector<72x128xf32>, vector<48x128xf32> -> vector<48x128xf32>
    %c0_16 = arith.constant 0 : index
    %c0_17 = arith.constant 0 : index
    %23 = vector.load %arg4[%c0_16, %c0_17] : memref<48x1xf32, #tpu.memory_space<vmem>>, vector<48x1xf32>
    %24 = vector.broadcast %23 : vector<48x1xf32> to vector<48x128xf32>
    %25 = arith.addf %22, %24 : vector<48x128xf32>
    %cst_18 = arith.constant 0.000000e+00 : f32
    %26 = vector.broadcast %cst_18 : f32 to vector<48x128xf32>
    %27 = arith.maximumf %25, %26 : vector<48x128xf32>
    %c0_19 = arith.constant 0 : index
    %c0_20 = arith.constant 0 : index
    %c0_21 = arith.constant 0 : index
    %28 = vector.load %arg5[%c0_19, %c0_20, %c0_21] : memref<1x48x128xf32, #tpu.memory_space<vmem>>, vector<1x48x128xf32>
    %29 = vector.shape_cast %28 : vector<1x48x128xf32> to vector<48x128xf32>
    %30 = vector.shape_cast %27 : vector<48x128xf32> to vector<1x48x128xf32>
    tpu.vector_store %arg5[%c0_19, %c0_20, %c0_21], %30 {strides = array<i32>} : memref<1x48x128xf32, #tpu.memory_space<vmem>>, vector<1x48x128xf32>,
    return
  }
  func.func @transform_0(%arg0: i32, %arg1: i32) -> (i32, i32, i32) {
    %c0_i32 = arith.constant 0 : i32
    %c0_i32_0 = arith.constant 0 : i32
    %c0_i32_1 = arith.constant 0 : i32
    return %arg0, %c0_i32, %c0_i32_0 : i32, i32, i32
  }
  func.func @transform_1(%arg0: i32, %arg1: i32) -> (i32, i32) {
    %c0_i32 = arith.constant 0 : i32
    %c0_i32_0 = arith.constant 0 : i32
    %c0_i32_1 = arith.constant 0 : i32
    return %c0_i32, %c0_i32_0 : i32, i32
  }
  func.func @transform_2(%arg0: i32, %arg1: i32) -> (i32, i32) {
    %c0_i32 = arith.constant 0 : i32
    %c0_i32_0 = arith.constant 0 : i32
    %c0_i32_1 = arith.constant 0 : i32
    return %c0_i32, %c0_i32_0 : i32, i32
  }
  func.func @transform_3(%arg0: i32, %arg1: i32) -> (i32, i32, i32) {
    %c0_i32 = arith.constant 0 : i32
    %c0_i32_0 = arith.constant 0 : i32
    return %arg0, %c0_i32, %arg1 : i32, i32, i32
  }
}

module attributes {stable_mosaic.version = 11 : i64} {
  func.func @_conv_gemm_kernel(%arg0: i32, %arg1: i32, %arg2: memref<1x16x512xf32, #tpu.memory_space<vmem>>, %arg3: memref<8x144xf32, #tpu.memory_space<vmem>>, %arg4: memref<8x1xf32, #tpu.memory_space<vmem>>, %arg5: memref<1x8x384xf32, #tpu.memory_space<vmem>>, %arg6: memref<144x384xf32, #tpu.memory_space<vmem>>) attributes {dimension_semantics = [#tpu.dimension_semantics<parallel>, #tpu.dimension_semantics<parallel>], iteration_bounds = array<i64: 2, 1>, scalar_prefetch = 0 : i64, scratch_operands = 1 : i64, tpu.core_type = #tpu.core_type<tc>, window_params = [{transform_indices = @transform_0, window_bounds = array<i64: 1, 16, 512>}, {pipeline_mode = #tpu.pipeline_mode<synchronous>, transform_indices = @transform_1, window_bounds = array<i64: 8, 144>}, {pipeline_mode = #tpu.pipeline_mode<synchronous>, transform_indices = @transform_2, window_bounds = array<i64: 8, 1>}, {transform_indices = @transform_3, window_bounds = array<i64: 1, 8, 384>}]} {
    %c0 = arith.constant 0 : index
    %c0_0 = arith.constant 0 : index
    %c0_1 = arith.constant 0 : index
    %0 = vector.load %arg2[%c0, %c0_0, %c0_1] : memref<1x16x512xf32, #tpu.memory_space<vmem>>, vector<1x16x512xf32>
    %1 = vector.shape_cast %0 : vector<1x16x512xf32> to vector<16x512xf32>
    %2 = vector.extract_strided_slice %1 {offsets = [0, 0], sizes = [16, 384], strides = [1, 1]} : vector<16x512xf32> to vector<16x384xf32>
    %c0_2 = arith.constant 0 : index
    %c0_3 = arith.constant 0 : index
    %3 = vector.load %arg6[%c0_2, %c0_3] : memref<144x384xf32, #tpu.memory_space<vmem>>, vector<16x384xf32>
    tpu.vector_store %arg6[%c0_2, %c0_3], %2 {strides = array<i32>} : memref<144x384xf32, #tpu.memory_space<vmem>>, vector<16x384xf32>,
    %4 = vector.extract_strided_slice %1 {offsets = [0, 1], sizes = [16, 384], strides = [1, 1]} : vector<16x512xf32> to vector<16x384xf32>
    %c16 = arith.constant 16 : index
    %c0_4 = arith.constant 0 : index
    %5 = vector.load %arg6[%c16, %c0_4] : memref<144x384xf32, #tpu.memory_space<vmem>>, vector<16x384xf32>
    tpu.vector_store %arg6[%c16, %c0_4], %4 {strides = array<i32>} : memref<144x384xf32, #tpu.memory_space<vmem>>, vector<16x384xf32>,
    %6 = vector.extract_strided_slice %1 {offsets = [0, 2], sizes = [16, 384], strides = [1, 1]} : vector<16x512xf32> to vector<16x384xf32>
    %c32 = arith.constant 32 : index
    %c0_5 = arith.constant 0 : index
    %7 = vector.load %arg6[%c32, %c0_5] : memref<144x384xf32, #tpu.memory_space<vmem>>, vector<16x384xf32>
    tpu.vector_store %arg6[%c32, %c0_5], %6 {strides = array<i32>} : memref<144x384xf32, #tpu.memory_space<vmem>>, vector<16x384xf32>,
    %8 = vector.extract_strided_slice %1 {offsets = [0, 18], sizes = [16, 384], strides = [1, 1]} : vector<16x512xf32> to vector<16x384xf32>
    %c48 = arith.constant 48 : index
    %c0_6 = arith.constant 0 : index
    %9 = vector.load %arg6[%c48, %c0_6] : memref<144x384xf32, #tpu.memory_space<vmem>>, vector<16x384xf32>
    tpu.vector_store %arg6[%c48, %c0_6], %8 {strides = array<i32>} : memref<144x384xf32, #tpu.memory_space<vmem>>, vector<16x384xf32>,
    %10 = vector.extract_strided_slice %1 {offsets = [0, 19], sizes = [16, 384], strides = [1, 1]} : vector<16x512xf32> to vector<16x384xf32>
    %c64 = arith.constant 64 : index
    %c0_7 = arith.constant 0 : index
    %11 = vector.load %arg6[%c64, %c0_7] : memref<144x384xf32, #tpu.memory_space<vmem>>, vector<16x384xf32>
    tpu.vector_store %arg6[%c64, %c0_7], %10 {strides = array<i32>} : memref<144x384xf32, #tpu.memory_space<vmem>>, vector<16x384xf32>,
    %12 = vector.extract_strided_slice %1 {offsets = [0, 20], sizes = [16, 384], strides = [1, 1]} : vector<16x512xf32> to vector<16x384xf32>
    %c80 = arith.constant 80 : index
    %c0_8 = arith.constant 0 : index
    %13 = vector.load %arg6[%c80, %c0_8] : memref<144x384xf32, #tpu.memory_space<vmem>>, vector<16x384xf32>
    tpu.vector_store %arg6[%c80, %c0_8], %12 {strides = array<i32>} : memref<144x384xf32, #tpu.memory_space<vmem>>, vector<16x384xf32>,
    %14 = vector.extract_strided_slice %1 {offsets = [0, 36], sizes = [16, 384], strides = [1, 1]} : vector<16x512xf32> to vector<16x384xf32>
    %c96 = arith.constant 96 : index
    %c0_9 = arith.constant 0 : index
    %15 = vector.load %arg6[%c96, %c0_9] : memref<144x384xf32, #tpu.memory_space<vmem>>, vector<16x384xf32>
    tpu.vector_store %arg6[%c96, %c0_9], %14 {strides = array<i32>} : memref<144x384xf32, #tpu.memory_space<vmem>>, vector<16x384xf32>,
    %16 = vector.extract_strided_slice %1 {offsets = [0, 37], sizes = [16, 384], strides = [1, 1]} : vector<16x512xf32> to vector<16x384xf32>
    %c112 = arith.constant 112 : index
    %c0_10 = arith.constant 0 : index
    %17 = vector.load %arg6[%c112, %c0_10] : memref<144x384xf32, #tpu.memory_space<vmem>>, vector<16x384xf32>
    tpu.vector_store %arg6[%c112, %c0_10], %16 {strides = array<i32>} : memref<144x384xf32, #tpu.memory_space<vmem>>, vector<16x384xf32>,
    %18 = vector.extract_strided_slice %1 {offsets = [0, 38], sizes = [16, 384], strides = [1, 1]} : vector<16x512xf32> to vector<16x384xf32>
    %c128 = arith.constant 128 : index
    %c0_11 = arith.constant 0 : index
    %19 = vector.load %arg6[%c128, %c0_11] : memref<144x384xf32, #tpu.memory_space<vmem>>, vector<16x384xf32>
    tpu.vector_store %arg6[%c128, %c0_11], %18 {strides = array<i32>} : memref<144x384xf32, #tpu.memory_space<vmem>>, vector<16x384xf32>,
    %c0_12 = arith.constant 0 : index
    %c0_13 = arith.constant 0 : index
    %20 = vector.load %arg3[%c0_12, %c0_13] : memref<8x144xf32, #tpu.memory_space<vmem>>, vector<8x144xf32>
    %c0_14 = arith.constant 0 : index
    %c0_15 = arith.constant 0 : index
    %21 = vector.load %arg6[%c0_14, %c0_15] : memref<144x384xf32, #tpu.memory_space<vmem>>, vector<144x384xf32>
    %cst = arith.constant dense<0.000000e+00> : vector<8x384xf32>
    %22 = tpu.matmul %20, %21, %cst {dimension_numbers = #tpu.dot_dimension_numbers<[1], [0], [0], [1], [0, 0, 1, 1], [], []>} : vector<8x144xf32>, vector<144x384xf32>, vector<8x384xf32> -> vector<8x384xf32>
    %c0_16 = arith.constant 0 : index
    %c0_17 = arith.constant 0 : index
    %23 = vector.load %arg4[%c0_16, %c0_17] : memref<8x1xf32, #tpu.memory_space<vmem>>, vector<8x1xf32>
    %24 = vector.broadcast %23 : vector<8x1xf32> to vector<8x384xf32>
    %25 = arith.addf %22, %24 : vector<8x384xf32>
    %c0_18 = arith.constant 0 : index
    %c0_19 = arith.constant 0 : index
    %c0_20 = arith.constant 0 : index
    %26 = vector.load %arg5[%c0_18, %c0_19, %c0_20] : memref<1x8x384xf32, #tpu.memory_space<vmem>>, vector<1x8x384xf32>
    %27 = vector.shape_cast %26 : vector<1x8x384xf32> to vector<8x384xf32>
    %28 = vector.shape_cast %25 : vector<8x384xf32> to vector<1x8x384xf32>
    tpu.vector_store %arg5[%c0_18, %c0_19, %c0_20], %28 {strides = array<i32>} : memref<1x8x384xf32, #tpu.memory_space<vmem>>, vector<1x8x384xf32>,
    return
  }
  func.func @transform_0(%arg0: i32, %arg1: i32) -> (i32, i32, i32) {
    %c0_i32 = arith.constant 0 : i32
    %c0_i32_0 = arith.constant 0 : i32
    %c0_i32_1 = arith.constant 0 : i32
    return %arg0, %c0_i32, %c0_i32_0 : i32, i32, i32
  }
  func.func @transform_1(%arg0: i32, %arg1: i32) -> (i32, i32) {
    %c0_i32 = arith.constant 0 : i32
    %c0_i32_0 = arith.constant 0 : i32
    %c0_i32_1 = arith.constant 0 : i32
    return %c0_i32, %c0_i32_0 : i32, i32
  }
  func.func @transform_2(%arg0: i32, %arg1: i32) -> (i32, i32) {
    %c0_i32 = arith.constant 0 : i32
    %c0_i32_0 = arith.constant 0 : i32
    %c0_i32_1 = arith.constant 0 : i32
    return %c0_i32, %c0_i32_0 : i32, i32
  }
  func.func @transform_3(%arg0: i32, %arg1: i32) -> (i32, i32, i32) {
    %c0_i32 = arith.constant 0 : i32
    %c0_i32_0 = arith.constant 0 : i32
    return %arg0, %c0_i32, %arg1 : i32, i32, i32
  }
}

</mosaic_0001>

<llo_original>
// kernel: tile.13
$region0: #{tile.13}
  #allocation0 [shape = 's32[1]{0}', space=sflag, size = 0x4, scoped, tag = 'scoped memory for tile.13']
  %s0 = inlined_call_operand.vmem [shape: f32[8], index: 0, kind: input, shape index: {}]
  %s1 = inlined_call_operand.vmem [shape: f32[4,8], index: 1, kind: output, shape index: {}]
  // Predicated region
  $region2: #{tile.13} parent=0 // pred_check
    _
  $region3: #{tile.13} parent=0 // pred_check_branch
    %3 = sbr.rel (0) target = $region5
  $region4: #{tile.13} parent=0 // pred_region
    _
  $region5: #{tile.13} parent=0 // pred_fallthru
    _
  %v4 = vld [vmem:[%s0] ss:$0 sm:$0xff]
  %5 = vst [vmem:[%s1] sm:$0xf] %v4

// kernel: tile.18
$region0: #{tile.18}
  #allocation0 [shape = 's32[1]{0}', space=sflag, size = 0x4, scoped, tag = 'scoped memory for tile.18']
  %s0 = inlined_call_operand.vmem [shape: f32[12], index: 0, kind: input, shape index: {}]
  %s1 = inlined_call_operand.vmem [shape: f32[4,12], index: 1, kind: output, shape index: {}]
  // Predicated region
  $region2: #{tile.18} parent=0 // pred_check
    _
  $region3: #{tile.18} parent=0 // pred_check_branch
    %3 = sbr.rel (0) target = $region5
  $region4: #{tile.18} parent=0 // pred_region
    _
  $region5: #{tile.18} parent=0 // pred_fallthru
    _
  %v4 = vld [vmem:[%s0] ss:$0 sm:$0xff]
  %5 = vst [vmem:[%s1] sm:$0xf] %v4

// kernel: resi_decoder_forward.3
$region0: #{resi_decoder_forward.3}
  #allocation0 [shape = 'u32[]', space=smem, size = 0x4, offset = 0x4, fixed_abs, tag = 'smem constant byte address 0x4 - core index']
  #allocation1 [shape = 'u32[72,128]{1,0:T(1,128)}', space=vmem, size = 0x9000, scoped, tag = 'internal scratch']
  #allocation2 [shape = 'f32[72,128]{1,0:T(8,128)}', space=vmem, size = 0x9000, scoped, tag = 'scratch operand']
  %s0 = inlined_call_operand.vmem [shape: f32[2,8,256], index: 0, kind: input, shape index: {}]
  %s1 = inlined_call_operand.vmem [shape: f32[32,72], index: 1, kind: input, shape index: {}]
  %s2 = inlined_call_operand.vmem [shape: f32[32,1], index: 2, kind: input, shape index: {}]
  %s3 = inlined_call_operand.vmem [shape: f32[2,32,128], index: 3, kind: output, shape index: {}]
  %s4 = sld [smem:[#allocation0]]
  $region45: #{resi_decoder_forward.3} parent=0
    _
  %s6 = ssub.s32 1, %s4
  %s7 = scalar_select 0, %s6, %s4
  loop: start=0, step=1, limit=4
  $region2: #{resi_decoder_forward.3} parent=0 // loop_pre_header
    _
  $region3: #{resi_decoder_forward.3} parent=0 // loop_header
    %s9 = sphi 0, %s13
    %p10 = scmp.ge.s32.totalorder %s9, 4
    %s16 = sphi 0, %s28
    %s17 = sphi 0, %s24
    %s18 = sphi 0, %s16
    %s19 = sphi 0, %s17
    %s20 = sphi 0, %s18
    %s21 = sphi 0, %s19
    %s31 = sphi 0, %s33
    %s34 = sphi 0, %s31
    %s35 = sphi 0, %s34
    %s51 = sphi 0, %s35
    %s55 = sphi 0, %s55
    %s57 = sphi 0, %s55
    %s58 = sphi 0, %s57
    %s72 = sphi 0, %s58
    %s76 = sphi 0, %s76
    %s78 = sphi 0, %s76
    %s79 = sphi 0, %s78
    %s93 = sphi 0, %s79
    %s101 = sphi 0, %s103
    %s104 = sphi 0, %s101
    %s105 = sphi 0, %s104
    %s121 = sphi 0, %s105
  $region4: #{resi_decoder_forward.3} parent=0 // loop_header_branch
    %12 = sbr.rel (%p10) target = $region8
  $region5: #{resi_decoder_forward.3} parent=0 // loop_body
    %s14 = ssub.s32 %s9, 1
    %s15 = ssub.s32 %s9, 2
    %s22 = sadd.s32 1, %s17
    %p23 = scmp.ge.s32.totalorder %s22, 1
    %s24 = scalar_select %p23, 0, %s22
    %s25 = sadd.s32 1, %s16
    %s26 = scalar_select %p23, %s25, %s16
    %p27 = scmp.ge.s32.totalorder %s26, 2
    %s28 = scalar_select %p27, 0, %s26
    %s29 = ssub.s32 %s16, %s28
    %p30 = scmp.eq.s32.totalorder %s29, 0
    %s32 = sadd.s32 %s31, 1
    %s33 = scalar_select %p30, %s31, %s32
    %p36 = pneg %p30
    %p37 = scmp.eq.s32.totalorder %s9, 1
    %p38 = por %p36, %p37
    %p39 = scmp.ne.s32.totalorder %s31, %s34
    %p40 = scmp.eq.s32.totalorder %s9, 0
    %p41 = por %p39, %p40
    %p42 = scmp.ne.s32.totalorder %s31, %s34
    %p43 = scmp.eq.s32.totalorder %s14, 1
    %p44 = por %p42, %p43
    %p45 = scmp.ne.s32.totalorder %s34, %s35
    %p46 = scmp.eq.s32.totalorder %s14, 0
    %p47 = por %p45, %p46
    %p48 = scmp.ne.s32.totalorder %s34, %s35
    %p49 = scmp.eq.s32.totalorder %s15, 1
    %p50 = por %p48, %p49
    %p52 = scmp.ne.s32.totalorder %s35, %s51
    %p53 = scmp.eq.s32.totalorder %s15, 0
    %p54 = por %p52, %p53
    %s56 = sadd.s32 %s55, 1
    %p59 = scmp.eq.s32.totalorder %s9, 1
    %p60 = scmp.ne.s32.totalorder %s55, %s57
    %p61 = scmp.eq.s32.totalorder %s9, 0
    %p62 = por %p60, %p61
    %p63 = scmp.ne.s32.totalorder %s55, %s57
    %p64 = scmp.eq.s32.totalorder %s14, 1
    %p65 = por %p63, %p64
    %p66 = scmp.ne.s32.totalorder %s57, %s58
    %p67 = scmp.eq.s32.totalorder %s14, 0
    %p68 = por %p66, %p67
    %p69 = scmp.ne.s32.totalorder %s57, %s58
    %p70 = scmp.eq.s32.totalorder %s15, 1
    %p71 = por %p69, %p70
    %p73 = scmp.ne.s32.totalorder %s58, %s72
    %p74 = scmp.eq.s32.totalorder %s15, 0
    %p75 = por %p73, %p74
    %s77 = sadd.s32 %s76, 1
    %p80 = scmp.eq.s32.totalorder %s9, 1
    %p81 = scmp.ne.s32.totalorder %s76, %s78
    %p82 = scmp.eq.s32.totalorder %s9, 0
    %p83 = por %p81, %p82
    %p84 = scmp.ne.s32.totalorder %s76, %s78
    %p85 = scmp.eq.s32.totalorder %s14, 1
    %p86 = por %p84, %p85
    %p87 = scmp.ne.s32.totalorder %s78, %s79
    %p88 = scmp.eq.s32.totalorder %s14, 0
    %p89 = por %p87, %p88
    %p90 = scmp.ne.s32.totalorder %s78, %s79
    %p91 = scmp.eq.s32.totalorder %s15, 1
    %p92 = por %p90, %p91
    %p94 = scmp.ne.s32.totalorder %s79, %s93
    %p95 = scmp.eq.s32.totalorder %s15, 0
    %p96 = por %p94, %p95
    %s97 = ssub.s32 %s16, %s28
    %s98 = ssub.s32 %s17, %s24
    %s99 = sor.u32 %s97, %s98
    %p100 = scmp.eq.s32.totalorder %s99, 0
    %s102 = sadd.s32 %s101, 1
    %s103 = scalar_select %p100, %s101, %s102
    %p106 = pneg %p100
    %p107 = scmp.eq.s32.totalorder %s9, 1
    %p108 = por %p106, %p107
    %p109 = scmp.ne.s32.totalorder %s101, %s104
    %p110 = scmp.eq.s32.totalorder %s9, 0
    %p111 = por %p109, %p110
    %p112 = scmp.ne.s32.totalorder %s101, %s104
    %p113 = scmp.eq.s32.totalorder %s14, 1
    %p114 = por %p112, %p113
    %p115 = scmp.ne.s32.totalorder %s104, %s105
    %p116 = scmp.eq.s32.totalorder %s14, 0
    %p117 = por %p115, %p116
    %p118 = scmp.ne.s32.totalorder %s104, %s105
    %p119 = scmp.eq.s32.totalorder %s15, 1
    %p120 = por %p118, %p119
    %p122 = scmp.ne.s32.totalorder %s105, %s121
    %p123 = scmp.eq.s32.totalorder %s15, 0
    %p124 = por %p122, %p123
    %p125 = scmp.le.s32.totalorder 1, %s9
    %p126 = scmp.lt.s32.totalorder %s9, 3
    %p127 = pnand %p125, %p126
    %p128 = pneg %p127
    // Predicated region
    $region9: #{resi_decoder_forward.3} parent=5 // pred_check
      _
    $region10: #{resi_decoder_forward.3} parent=5 // pred_check_branch
      %130 = sbr.rel (%p127) target = $region12
    $region11: #{resi_decoder_forward.3} parent=5 // pred_region
      %s131 = ssub.s32 %s9, 1
      // Predicated region
      $region13: #{resi_decoder_forward.3} parent=11 // pred_check
        %p132 = pneg %p68
      $region14: #{resi_decoder_forward.3} parent=11 // pred_check_branch
        %134 = sbr.rel (%p132) target = $region16
      $region15: #{resi_decoder_forward.3} parent=11 // pred_region
        _
      $region16: #{resi_decoder_forward.3} parent=11 // pred_fallthru
        _
      // Predicated region
      $region17: #{resi_decoder_forward.3} parent=11 // pred_check
        %p135 = pneg %p89
      $region18: #{resi_decoder_forward.3} parent=11 // pred_check_branch
        %137 = sbr.rel (%p135) target = $region20
      $region19: #{resi_decoder_forward.3} parent=11 // pred_region
        _
      $region20: #{resi_decoder_forward.3} parent=11 // pred_fallthru
        _
    $region12: #{resi_decoder_forward.3} parent=5 // pred_fallthru
      _
    %p138 = scmp.lt.s32.totalorder %s9, 2
    // Predicated region
    $region21: #{resi_decoder_forward.3} parent=5 // pred_check
      %p139 = pneg %p138
    $region22: #{resi_decoder_forward.3} parent=5 // pred_check_branch
      %141 = sbr.rel (%p139) target = $region24
    $region23: #{resi_decoder_forward.3} parent=5 // pred_region
      // Predicated region
      $region25: #{resi_decoder_forward.3} parent=23 // pred_check
        %p142 = pneg %p41
      $region26: #{resi_decoder_forward.3} parent=23 // pred_check_branch
        %144 = sbr.rel (%p142) target = $region28
      $region27: #{resi_decoder_forward.3} parent=23 // pred_region
        %p145 = scmp.lt.s32.totalorder %s16, 1
        %s146 = scalar_select %p145, %s16, 1
        %s147 = smul.addr %s146, 2
        %s148 = smul.addr %s147, 8
        %s149 = scalar_lea.vmem %s0, %s148
      $region28: #{resi_decoder_forward.3} parent=23 // pred_fallthru
        _
    $region24: #{resi_decoder_forward.3} parent=5 // pred_fallthru
      _
    %p150 = scmp.le.s32.totalorder 1, %s9
    %p151 = scmp.lt.s32.totalorder %s9, 3
    %p152 = pnand %p150, %p151
    %p153 = pneg %p152
    // Predicated region
    $region29: #{resi_decoder_forward.3} parent=5 // pred_check
      _
    $region30: #{resi_decoder_forward.3} parent=5 // pred_check_branch
      %155 = sbr.rel (%p152) target = $region32
    $region31: #{resi_decoder_forward.3} parent=5 // pred_region
      %s156 = ssub.s32 %s9, 1
      %p157 = scmp.lt.s32.totalorder %s18, 1
      %s158 = scalar_select %p157, %s18, 1
      %s159 = smul.addr %s158, 2
      %s160 = smul.addr %s159, 8
      %s161 = scalar_lea.vmem %s0, %s160
      %p162 = pneg %p47
      %p163 = pneg %p44
      %p164 = pneg %p68
      %p165 = pneg %p65
      %p166 = pneg %p89
      %p167 = pneg %p86
      %p168 = pneg %p117
      %p169 = pneg %p114
      %p170 = scmp.lt.s32.totalorder %s18, 1
      %s171 = scalar_select %p170, %s18, 1
      %p172 = scmp.lt.s32.totalorder %s19, 0
      %s173 = scalar_select %p172, %s19, 0
      %s174 = smul.addr %s171, 4
      %s175 = sadd.s32 %s173, %s174
      %s176 = smul.addr %s175, 8
      %s177 = scalar_lea.vmem %s3, %s176
      %p178 = scmp.lt.s32.totalorder %s18, 1
      %s179 = scalar_select %p178, %s18, 1
      %s180 = smul.addr %s179, 2
      %s181 = smul.addr %s180, 8
      %s182 = scalar_lea.vmem %s0, %s181
      %p183 = scmp.lt.s32.totalorder %s18, 1
      %s184 = scalar_select %p183, %s18, 1
      %p185 = scmp.lt.s32.totalorder %s19, 0
      %s186 = scalar_select %p185, %s19, 0
      %s187 = smul.addr %s184, 4
      %s188 = sadd.s32 %s186, %s187
      %s189 = smul.addr %s188, 8
      %s190 = scalar_lea.vmem %s3, %s189
      %v191 = vld [vmem:[%s182] sm:$0xff]
      %v192 = vld [vmem:[%s182 + $0x8] sm:$0xff]
      %193 = vst [vmem:[#allocation2] sm:$0xff] %v191
      %196 = vrot.lane.b32.xlu0 %v191, 127
      %v197 = vpop.permute.xlu0 %196
      %198 = vrot.lane.b32.xlu0 %v192, 127
      %v199 = vpop.permute.xlu0 %198
      %vm200 = vcmask 1039360
      %v201 = vsel %vm200, %v197, %v199
      %203 = vst [vmem:[#allocation2 + $0x8] sm:$0xff] %v201
      %204 = vrot.lane.b32.xlu0 %v191, 126
      %v205 = vpop.permute.xlu0 %204
      %206 = vrot.lane.b32.xlu0 %v192, 126
      %v207 = vpop.permute.xlu0 %206
      %vm208 = vcmask 1031168
      %v209 = vsel %vm208, %v205, %v207
      %211 = vst [vmem:[#allocation2 + $0x10] sm:$0xff] %v209
      %212 = vrot.lane.b32.xlu0 %v191, 122
      %v213 = vpop.permute.xlu0 %212
      %214 = vrot.lane.b32.xlu0 %v192, 122
      %v215 = vpop.permute.xlu0 %214
      %vm216 = vcmask 998400
      %v217 = vsel %vm216, %v213, %v215
      %219 = vst [vmem:[#allocation2 + $0x18] sm:$0xff] %v217
      %220 = vrot.lane.b32.xlu0 %v191, 121
      %v221 = vpop.permute.xlu0 %220
      %222 = vrot.lane.b32.xlu0 %v192, 121
      %v223 = vpop.permute.xlu0 %222
      %vm224 = vcmask 990208
      %v225 = vsel %vm224, %v221, %v223
      %227 = vst [vmem:[#allocation2 + $0x20] sm:$0xff] %v225
      %228 = vrot.lane.b32.xlu0 %v191, 120
      %v229 = vpop.permute.xlu0 %228
      %230 = vrot.lane.b32.xlu0 %v192, 120
      %v231 = vpop.permute.xlu0 %230
      %vm232 = vcmask 982016
      %v233 = vsel %vm232, %v229, %v231
      %235 = vst [vmem:[#allocation2 + $0x28] sm:$0xff] %v233
      %236 = vrot.lane.b32.xlu0 %v191, 116
      %v237 = vpop.permute.xlu0 %236
      %238 = vrot.lane.b32.xlu0 %v192, 116
      %v239 = vpop.permute.xlu0 %238
      %vm240 = vcmask 949248
      %v241 = vsel %vm240, %v237, %v239
      %243 = vst [vmem:[#allocation2 + $0x30] sm:$0xff] %v241
      %244 = vrot.lane.b32.xlu0 %v191, 115
      %v245 = vpop.permute.xlu0 %244
      %246 = vrot.lane.b32.xlu0 %v192, 115
      %v247 = vpop.permute.xlu0 %246
      %vm248 = vcmask 941056
      %v249 = vsel %vm248, %v245, %v247
      %251 = vst [vmem:[#allocation2 + $0x38] sm:$0xff] %v249
      %252 = vrot.lane.b32.xlu0 %v191, 114
      %v253 = vpop.permute.xlu0 %252
      %254 = vrot.lane.b32.xlu0 %v192, 114
      %v255 = vpop.permute.xlu0 %254
      %vm256 = vcmask 932864
      %v257 = vsel %vm256, %v253, %v255
      %259 = vst [vmem:[#allocation2 + $0x40] sm:$0xff] %v257
      %v260 = vld [vmem:[%s1] sm:$0xff]
      %v261 = vld [vmem:[%s1 + $0x8] sm:$0xff]
      %v262 = vld [vmem:[%s1 + $0x10] sm:$0xff]
      %v263 = vld [vmem:[%s1 + $0x18] sm:$0xff]
      %v264 = vld [vmem:[#allocation2] sm:$0xff]
      %v265 = vld [vmem:[#allocation2 + $0x8] sm:$0xff]
      %v266 = vld [vmem:[#allocation2 + $0x10] sm:$0xff]
      %v267 = vld [vmem:[#allocation2 + $0x18] sm:$0xff]
      %v268 = vld [vmem:[#allocation2 + $0x20] sm:$0xff]
      %v269 = vld [vmem:[#allocation2 + $0x28] sm:$0xff]
      %v270 = vld [vmem:[#allocation2 + $0x30] sm:$0xff]
      %v271 = vld [vmem:[#allocation2 + $0x38] sm:$0xff]
      %v272 = vld [vmem:[#allocation2 + $0x40] sm:$0xff]
      %v273 = vld [vmem:[%s2] sm:$0xff]
      %v274 = vld [vmem:[%s2 + $0x8] sm:$0xff]
      %v275 = vld [vmem:[%s2 + $0x10] sm:$0xff]
      %v276 = vld [vmem:[%s2 + $0x18] sm:$0xff]
      %278 = vset.pattern.permute.xlu0 0
      %279 = vperm.xlu0 %278, %v273
      %v280 = vpop.permute.xlu0 %279
      %283 = vset.pattern.permute.xlu0 0
      %284 = vperm.xlu0 %283, %v274
      %v285 = vpop.permute.xlu0 %284
      %288 = vset.pattern.permute.xlu0 0
      %289 = vperm.xlu0 %288, %v275
      %v290 = vpop.permute.xlu0 %289
      %293 = vset.pattern.permute.xlu0 0
      %294 = vperm.xlu0 %293, %v276
      %v295 = vpop.permute.xlu0 %294
      %vm297 = vcmask 588800
      %v299 = vsel %vm297, %v260, 0
      %v302 = vsel %vm297, %v261, 0
      %v305 = vsel %vm297, %v262, 0
      %v308 = vsel %vm297, %v263, 0
      %310 = vmatpush.msra.mxu0 0.0
      %311 = vmatpush.msra.mxu0 0.0
      %312 = vmatpush.msra.mxu0 0.0
      %313 = vmatpush.msra.mxu0 0.0
      %314 = vmatpush.msra.mxu0 0.0
      %315 = vmatpush.msra.mxu0 0.0
      %316 = vmatpush.msra.mxu0 0.0
      %317 = vmatpush.msra.mxu0 %v272
      %318 = vmatpush.msra.mxu0 %v271
      %319 = vmatpush.msra.mxu0 %v270
      %320 = vmatpush.msra.mxu0 %v269
      %321 = vmatpush.msra.mxu0 %v268
      %322 = vmatpush.msra.mxu0 %v267
      %323 = vmatpush.msra.mxu0 %v266
      %324 = vmatpush.msra.mxu0 %v265
      %325 = vmatpush.msra.mxu0 %v264
      %326 = vmatmul.f32.gmra.mxu0 %v299
      %v327 = vpop.f32.mrf.mxu0
      %v328 = vadd.f32 %v280, %v327
      %329 = vmatmul.f32.gmra.mxu0 %v302
      %v330 = vpop.f32.mrf.mxu0
      %v331 = vadd.f32 %v285, %v330
      %332 = vmatmul.f32.gmra.mxu0 %v305
      %v333 = vpop.f32.mrf.mxu0
      %v334 = vadd.f32 %v290, %v333
      %335 = vmatmul.f32.gmra.mxu0 %v308
      %v336 = vpop.f32.mrf.mxu0
      %v337 = vadd.f32 %v295, %v336
      %338 = vdwg.mxu0
      %v339 = vmax.f32 %v328, 0.0
      %v340 = vmax.f32 %v331, 0.0
      %v341 = vmax.f32 %v334, 0.0
      %v342 = vmax.f32 %v337, 0.0
      %343 = vst [vmem:[%s190] sm:$0xff] %v339
      %344 = vst [vmem:[%s190 + $0x8] sm:$0xff] %v340
      %345 = vst [vmem:[%s190 + $0x10] sm:$0xff] %v341
      %346 = vst [vmem:[%s190 + $0x18] sm:$0xff] %v342
      %p347 = scmp.lt.s32.totalorder %s18, 1
      %s348 = scalar_select %p347, %s18, 1
      %p349 = scmp.lt.s32.totalorder %s19, 0
      %s350 = scalar_select %p349, %s19, 0
      %s351 = smul.addr %s348, 4
      %s352 = sadd.s32 %s350, %s351
      %s353 = smul.addr %s352, 8
      %s354 = scalar_lea.vmem %s3, %s353
      // Predicated region
      $region33: #{resi_decoder_forward.3} parent=31 // pred_check
        %p355 = pneg %p114
      $region34: #{resi_decoder_forward.3} parent=31 // pred_check_branch
        %357 = sbr.rel (%p355) target = $region36
      $region35: #{resi_decoder_forward.3} parent=31 // pred_region
        _
      $region36: #{resi_decoder_forward.3} parent=31 // pred_fallthru
        _
    $region32: #{resi_decoder_forward.3} parent=5 // pred_fallthru
      _
    %p358 = scmp.le.s32.totalorder 2, %s9
    // Predicated region
    $region37: #{resi_decoder_forward.3} parent=5 // pred_check
      %p359 = pneg %p358
    $region38: #{resi_decoder_forward.3} parent=5 // pred_check_branch
      %361 = sbr.rel (%p359) target = $region40
    $region39: #{resi_decoder_forward.3} parent=5 // pred_region
      %s362 = ssub.s32 %s9, 2
      // Predicated region
      $region41: #{resi_decoder_forward.3} parent=39 // pred_check
        %p363 = pneg %p120
      $region42: #{resi_decoder_forward.3} parent=39 // pred_check_branch
        %365 = sbr.rel (%p363) target = $region44
      $region43: #{resi_decoder_forward.3} parent=39 // pred_region
        %p366 = scmp.lt.s32.totalorder %s20, 1
        %s367 = scalar_select %p366, %s20, 1
        %p368 = scmp.lt.s32.totalorder %s21, 0
        %s369 = scalar_select %p368, %s21, 0
        %s370 = smul.addr %s367, 4
        %s371 = sadd.s32 %s369, %s370
        %s372 = smul.addr %s371, 8
        %s373 = scalar_lea.vmem %s3, %s372
      $region44: #{resi_decoder_forward.3} parent=39 // pred_fallthru
        _
    $region40: #{resi_decoder_forward.3} parent=5 // pred_fallthru
      _
  $region6: #{resi_decoder_forward.3} parent=0 // loop_footer
    %s13 = sadd.s32 1, %s9
  $region7: #{resi_decoder_forward.3} parent=0 // loop_footer_branch
    %8 = sbr.rel target = $region3
  $region8: #{resi_decoder_forward.3} parent=0 // loop_exit
    _

// kernel: resi_decoder_forward.4
$region0: #{resi_decoder_forward.4}
  #allocation0 [shape = 'u32[]', space=smem, size = 0x4, offset = 0x4, fixed_abs, tag = 'smem constant byte address 0x4 - core index']
  #allocation1 [shape = 'u32[72,128]{1,0:T(1,128)}', space=vmem, size = 0x9000, scoped, tag = 'internal scratch']
  #allocation2 [shape = 'f32[72,128]{1,0:T(8,128)}', space=vmem, size = 0x9000, scoped, tag = 'scratch operand']
  %s0 = inlined_call_operand.vmem [shape: f32[2,8,256], index: 0, kind: input, shape index: {}]
  %s1 = inlined_call_operand.vmem [shape: f32[48,72], index: 1, kind: input, shape index: {}]
  %s2 = inlined_call_operand.vmem [shape: f32[48,1], index: 2, kind: input, shape index: {}]
  %s3 = inlined_call_operand.vmem [shape: f32[2,48,128], index: 3, kind: output, shape index: {}]
  %s4 = sld [smem:[#allocation0]]
  $region45: #{resi_decoder_forward.4} parent=0
    _
  %s6 = ssub.s32 1, %s4
  %s7 = scalar_select 0, %s6, %s4
  loop: start=0, step=1, limit=4
  $region2: #{resi_decoder_forward.4} parent=0 // loop_pre_header
    _
  $region3: #{resi_decoder_forward.4} parent=0 // loop_header
    %s9 = sphi 0, %s13
    %p10 = scmp.ge.s32.totalorder %s9, 4
    %s16 = sphi 0, %s28
    %s17 = sphi 0, %s24
    %s18 = sphi 0, %s16
    %s19 = sphi 0, %s17
    %s20 = sphi 0, %s18
    %s21 = sphi 0, %s19
    %s31 = sphi 0, %s33
    %s34 = sphi 0, %s31
    %s35 = sphi 0, %s34
    %s51 = sphi 0, %s35
    %s55 = sphi 0, %s55
    %s57 = sphi 0, %s55
    %s58 = sphi 0, %s57
    %s72 = sphi 0, %s58
    %s76 = sphi 0, %s76
    %s78 = sphi 0, %s76
    %s79 = sphi 0, %s78
    %s93 = sphi 0, %s79
    %s101 = sphi 0, %s103
    %s104 = sphi 0, %s101
    %s105 = sphi 0, %s104
    %s121 = sphi 0, %s105
  $region4: #{resi_decoder_forward.4} parent=0 // loop_header_branch
    %12 = sbr.rel (%p10) target = $region8
  $region5: #{resi_decoder_forward.4} parent=0 // loop_body
    %s14 = ssub.s32 %s9, 1
    %s15 = ssub.s32 %s9, 2
    %s22 = sadd.s32 1, %s17
    %p23 = scmp.ge.s32.totalorder %s22, 1
    %s24 = scalar_select %p23, 0, %s22
    %s25 = sadd.s32 1, %s16
    %s26 = scalar_select %p23, %s25, %s16
    %p27 = scmp.ge.s32.totalorder %s26, 2
    %s28 = scalar_select %p27, 0, %s26
    %s29 = ssub.s32 %s16, %s28
    %p30 = scmp.eq.s32.totalorder %s29, 0
    %s32 = sadd.s32 %s31, 1
    %s33 = scalar_select %p30, %s31, %s32
    %p36 = pneg %p30
    %p37 = scmp.eq.s32.totalorder %s9, 1
    %p38 = por %p36, %p37
    %p39 = scmp.ne.s32.totalorder %s31, %s34
    %p40 = scmp.eq.s32.totalorder %s9, 0
    %p41 = por %p39, %p40
    %p42 = scmp.ne.s32.totalorder %s31, %s34
    %p43 = scmp.eq.s32.totalorder %s14, 1
    %p44 = por %p42, %p43
    %p45 = scmp.ne.s32.totalorder %s34, %s35
    %p46 = scmp.eq.s32.totalorder %s14, 0
    %p47 = por %p45, %p46
    %p48 = scmp.ne.s32.totalorder %s34, %s35
    %p49 = scmp.eq.s32.totalorder %s15, 1
    %p50 = por %p48, %p49
    %p52 = scmp.ne.s32.totalorder %s35, %s51
    %p53 = scmp.eq.s32.totalorder %s15, 0
    %p54 = por %p52, %p53
    %s56 = sadd.s32 %s55, 1
    %p59 = scmp.eq.s32.totalorder %s9, 1
    %p60 = scmp.ne.s32.totalorder %s55, %s57
    %p61 = scmp.eq.s32.totalorder %s9, 0
    %p62 = por %p60, %p61
    %p63 = scmp.ne.s32.totalorder %s55, %s57
    %p64 = scmp.eq.s32.totalorder %s14, 1
    %p65 = por %p63, %p64
    %p66 = scmp.ne.s32.totalorder %s57, %s58
    %p67 = scmp.eq.s32.totalorder %s14, 0
    %p68 = por %p66, %p67
    %p69 = scmp.ne.s32.totalorder %s57, %s58
    %p70 = scmp.eq.s32.totalorder %s15, 1
    %p71 = por %p69, %p70
    %p73 = scmp.ne.s32.totalorder %s58, %s72
    %p74 = scmp.eq.s32.totalorder %s15, 0
    %p75 = por %p73, %p74
    %s77 = sadd.s32 %s76, 1
    %p80 = scmp.eq.s32.totalorder %s9, 1
    %p81 = scmp.ne.s32.totalorder %s76, %s78
    %p82 = scmp.eq.s32.totalorder %s9, 0
    %p83 = por %p81, %p82
    %p84 = scmp.ne.s32.totalorder %s76, %s78
    %p85 = scmp.eq.s32.totalorder %s14, 1
    %p86 = por %p84, %p85
    %p87 = scmp.ne.s32.totalorder %s78, %s79
    %p88 = scmp.eq.s32.totalorder %s14, 0
    %p89 = por %p87, %p88
    %p90 = scmp.ne.s32.totalorder %s78, %s79
    %p91 = scmp.eq.s32.totalorder %s15, 1
    %p92 = por %p90, %p91
    %p94 = scmp.ne.s32.totalorder %s79, %s93
    %p95 = scmp.eq.s32.totalorder %s15, 0
    %p96 = por %p94, %p95
    %s97 = ssub.s32 %s16, %s28
    %s98 = ssub.s32 %s17, %s24
    %s99 = sor.u32 %s97, %s98
    %p100 = scmp.eq.s32.totalorder %s99, 0
    %s102 = sadd.s32 %s101, 1
    %s103 = scalar_select %p100, %s101, %s102
    %p106 = pneg %p100
    %p107 = scmp.eq.s32.totalorder %s9, 1
    %p108 = por %p106, %p107
    %p109 = scmp.ne.s32.totalorder %s101, %s104
    %p110 = scmp.eq.s32.totalorder %s9, 0
    %p111 = por %p109, %p110
    %p112 = scmp.ne.s32.totalorder %s101, %s104
    %p113 = scmp.eq.s32.totalorder %s14, 1
    %p114 = por %p112, %p113
    %p115 = scmp.ne.s32.totalorder %s104, %s105
    %p116 = scmp.eq.s32.totalorder %s14, 0
    %p117 = por %p115, %p116
    %p118 = scmp.ne.s32.totalorder %s104, %s105
    %p119 = scmp.eq.s32.totalorder %s15, 1
    %p120 = por %p118, %p119
    %p122 = scmp.ne.s32.totalorder %s105, %s121
    %p123 = scmp.eq.s32.totalorder %s15, 0
    %p124 = por %p122, %p123
    %p125 = scmp.le.s32.totalorder 1, %s9
    %p126 = scmp.lt.s32.totalorder %s9, 3
    %p127 = pnand %p125, %p126
    %p128 = pneg %p127
    // Predicated region
    $region9: #{resi_decoder_forward.4} parent=5 // pred_check
      _
    $region10: #{resi_decoder_forward.4} parent=5 // pred_check_branch
      %130 = sbr.rel (%p127) target = $region12
    $region11: #{resi_decoder_forward.4} parent=5 // pred_region
      %s131 = ssub.s32 %s9, 1
      // Predicated region
      $region13: #{resi_decoder_forward.4} parent=11 // pred_check
        %p132 = pneg %p68
      $region14: #{resi_decoder_forward.4} parent=11 // pred_check_branch
        %134 = sbr.rel (%p132) target = $region16
      $region15: #{resi_decoder_forward.4} parent=11 // pred_region
        _
      $region16: #{resi_decoder_forward.4} parent=11 // pred_fallthru
        _
      // Predicated region
      $region17: #{resi_decoder_forward.4} parent=11 // pred_check
        %p135 = pneg %p89
      $region18: #{resi_decoder_forward.4} parent=11 // pred_check_branch
        %137 = sbr.rel (%p135) target = $region20
      $region19: #{resi_decoder_forward.4} parent=11 // pred_region
        _
      $region20: #{resi_decoder_forward.4} parent=11 // pred_fallthru
        _
    $region12: #{resi_decoder_forward.4} parent=5 // pred_fallthru
      _
    %p138 = scmp.lt.s32.totalorder %s9, 2
    // Predicated region
    $region21: #{resi_decoder_forward.4} parent=5 // pred_check
      %p139 = pneg %p138
    $region22: #{resi_decoder_forward.4} parent=5 // pred_check_branch
      %141 = sbr.rel (%p139) target = $region24
    $region23: #{resi_decoder_forward.4} parent=5 // pred_region
      // Predicated region
      $region25: #{resi_decoder_forward.4} parent=23 // pred_check
        %p142 = pneg %p41
      $region26: #{resi_decoder_forward.4} parent=23 // pred_check_branch
        %144 = sbr.rel (%p142) target = $region28
      $region27: #{resi_decoder_forward.4} parent=23 // pred_region
        %p145 = scmp.lt.s32.totalorder %s16, 1
        %s146 = scalar_select %p145, %s16, 1
        %s147 = smul.addr %s146, 2
        %s148 = smul.addr %s147, 8
        %s149 = scalar_lea.vmem %s0, %s148
      $region28: #{resi_decoder_forward.4} parent=23 // pred_fallthru
        _
    $region24: #{resi_decoder_forward.4} parent=5 // pred_fallthru
      _
    %p150 = scmp.le.s32.totalorder 1, %s9
    %p151 = scmp.lt.s32.totalorder %s9, 3
    %p152 = pnand %p150, %p151
    %p153 = pneg %p152
    // Predicated region
    $region29: #{resi_decoder_forward.4} parent=5 // pred_check
      _
    $region30: #{resi_decoder_forward.4} parent=5 // pred_check_branch
      %155 = sbr.rel (%p152) target = $region32
    $region31: #{resi_decoder_forward.4} parent=5 // pred_region
      %s156 = ssub.s32 %s9, 1
      %p157 = scmp.lt.s32.totalorder %s18, 1
      %s158 = scalar_select %p157, %s18, 1
      %s159 = smul.addr %s158, 2
      %s160 = smul.addr %s159, 8
      %s161 = scalar_lea.vmem %s0, %s160
      %p162 = pneg %p47
      %p163 = pneg %p44
      %p164 = pneg %p68
      %p165 = pneg %p65
      %p166 = pneg %p89
      %p167 = pneg %p86
      %p168 = pneg %p117
      %p169 = pneg %p114
      %p170 = scmp.lt.s32.totalorder %s18, 1
      %s171 = scalar_select %p170, %s18, 1
      %p172 = scmp.lt.s32.totalorder %s19, 0
      %s173 = scalar_select %p172, %s19, 0
      %s174 = smul.addr %s171, 6
      %s175 = sadd.s32 %s173, %s174
      %s176 = smul.addr %s175, 8
      %s177 = scalar_lea.vmem %s3, %s176
      %p178 = scmp.lt.s32.totalorder %s18, 1
      %s179 = scalar_select %p178, %s18, 1
      %s180 = smul.addr %s179, 2
      %s181 = smul.addr %s180, 8
      %s182 = scalar_lea.vmem %s0, %s181
      %p183 = scmp.lt.s32.totalorder %s18, 1
      %s184 = scalar_select %p183, %s18, 1
      %p185 = scmp.lt.s32.totalorder %s19, 0
      %s186 = scalar_select %p185, %s19, 0
      %s187 = smul.addr %s184, 6
      %s188 = sadd.s32 %s186, %s187
      %s189 = smul.addr %s188, 8
      %s190 = scalar_lea.vmem %s3, %s189
      %v191 = vld [vmem:[%s182] sm:$0xff]
      %v192 = vld [vmem:[%s182 + $0x8] sm:$0xff]
      %193 = vst [vmem:[#allocation2] sm:$0xff] %v191
      %196 = vrot.lane.b32.xlu0 %v191, 127
      %v197 = vpop.permute.xlu0 %196
      %198 = vrot.lane.b32.xlu0 %v192, 127
      %v199 = vpop.permute.xlu0 %198
      %vm200 = vcmask 1039360
      %v201 = vsel %vm200, %v197, %v199
      %203 = vst [vmem:[#allocation2 + $0x8] sm:$0xff] %v201
      %204 = vrot.lane.b32.xlu0 %v191, 126
      %v205 = vpop.permute.xlu0 %204
      %206 = vrot.lane.b32.xlu0 %v192, 126
      %v207 = vpop.permute.xlu0 %206
      %vm208 = vcmask 1031168
      %v209 = vsel %vm208, %v205, %v207
      %211 = vst [vmem:[#allocation2 + $0x10] sm:$0xff] %v209
      %212 = vrot.lane.b32.xlu0 %v191, 118
      %v213 = vpop.permute.xlu0 %212
      %214 = vrot.lane.b32.xlu0 %v192, 118
      %v215 = vpop.permute.xlu0 %214
      %vm216 = vcmask 965632
      %v217 = vsel %vm216, %v213, %v215
      %219 = vst [vmem:[#allocation2 + $0x18] sm:$0xff] %v217
      %220 = vrot.lane.b32.xlu0 %v191, 117
      %v221 = vpop.permute.xlu0 %220
      %222 = vrot.lane.b32.xlu0 %v192, 117
      %v223 = vpop.permute.xlu0 %222
      %vm224 = vcmask 957440
      %v225 = vsel %vm224, %v221, %v223
      %227 = vst [vmem:[#allocation2 + $0x20] sm:$0xff] %v225
      %228 = vrot.lane.b32.xlu0 %v191, 116
      %v229 = vpop.permute.xlu0 %228
      %230 = vrot.lane.b32.xlu0 %v192, 116
      %v231 = vpop.permute.xlu0 %230
      %vm232 = vcmask 949248
      %v233 = vsel %vm232, %v229, %v231
      %235 = vst [vmem:[#allocation2 + $0x28] sm:$0xff] %v233
      %236 = vrot.lane.b32.xlu0 %v191, 108
      %v237 = vpop.permute.xlu0 %236
      %238 = vrot.lane.b32.xlu0 %v192, 108
      %v239 = vpop.permute.xlu0 %238
      %vm240 = vcmask 883712
      %v241 = vsel %vm240, %v237, %v239
      %243 = vst [vmem:[#allocation2 + $0x30] sm:$0xff] %v241
      %244 = vrot.lane.b32.xlu0 %v191, 107
      %v245 = vpop.permute.xlu0 %244
      %246 = vrot.lane.b32.xlu0 %v192, 107
      %v247 = vpop.permute.xlu0 %246
      %vm248 = vcmask 875520
      %v249 = vsel %vm248, %v245, %v247
      %251 = vst [vmem:[#allocation2 + $0x38] sm:$0xff] %v249
      %252 = vrot.lane.b32.xlu0 %v191, 106
      %v253 = vpop.permute.xlu0 %252
      %254 = vrot.lane.b32.xlu0 %v192, 106
      %v255 = vpop.permute.xlu0 %254
      %vm256 = vcmask 867328
      %v257 = vsel %vm256, %v253, %v255
      %259 = vst [vmem:[#allocation2 + $0x40] sm:$0xff] %v257
      %v260 = vld [vmem:[%s1] sm:$0xff]
      %v261 = vld [vmem:[%s1 + $0x8] sm:$0xff]
      %v262 = vld [vmem:[%s1 + $0x10] sm:$0xff]
      %v263 = vld [vmem:[%s1 + $0x18] sm:$0xff]
      %v264 = vld [vmem:[%s1 + $0x20] sm:$0xff]
      %v265 = vld [vmem:[%s1 + $0x28] sm:$0xff]
      %v266 = vld [vmem:[#allocation2] sm:$0xff]
      %v267 = vld [vmem:[#allocation2 + $0x8] sm:$0xff]
      %v268 = vld [vmem:[#allocation2 + $0x10] sm:$0xff]
      %v269 = vld [vmem:[#allocation2 + $0x18] sm:$0xff]
      %v270 = vld [vmem:[#allocation2 + $0x20] sm:$0xff]
      %v271 = vld [vmem:[#allocation2 + $0x28] sm:$0xff]
      %v272 = vld [vmem:[#allocation2 + $0x30] sm:$0xff]
      %v273 = vld [vmem:[#allocation2 + $0x38] sm:$0xff]
      %v274 = vld [vmem:[#allocation2 + $0x40] sm:$0xff]
      %v275 = vld [vmem:[%s2] sm:$0xff]
      %v276 = vld [vmem:[%s2 + $0x8] sm:$0xff]
      %v277 = vld [vmem:[%s2 + $0x10] sm:$0xff]
      %v278 = vld [vmem:[%s2 + $0x18] sm:$0xff]
      %v279 = vld [vmem:[%s2 + $0x20] sm:$0xff]
      %v280 = vld [vmem:[%s2 + $0x28] sm:$0xff]
      %282 = vset.pattern.permute.xlu0 0
      %283 = vperm.xlu0 %282, %v275
      %v284 = vpop.permute.xlu0 %283
      %287 = vset.pattern.permute.xlu0 0
      %288 = vperm.xlu0 %287, %v276
      %v289 = vpop.permute.xlu0 %288
      %292 = vset.pattern.permute.xlu0 0
      %293 = vperm.xlu0 %292, %v277
      %v294 = vpop.permute.xlu0 %293
      %297 = vset.pattern.permute.xlu0 0
      %298 = vperm.xlu0 %297, %v278
      %v299 = vpop.permute.xlu0 %298
      %302 = vset.pattern.permute.xlu0 0
      %303 = vperm.xlu0 %302, %v279
      %v304 = vpop.permute.xlu0 %303
      %307 = vset.pattern.permute.xlu0 0
      %308 = vperm.xlu0 %307, %v280
      %v309 = vpop.permute.xlu0 %308
      %vm311 = vcmask 588800
      %v313 = vsel %vm311, %v260, 0
      %v316 = vsel %vm311, %v261, 0
      %v319 = vsel %vm311, %v262, 0
      %v322 = vsel %vm311, %v263, 0
      %v325 = vsel %vm311, %v264, 0
      %v328 = vsel %vm311, %v265, 0
      %330 = vmatpush.msra.mxu0 0.0
      %331 = vmatpush.msra.mxu0 0.0
      %332 = vmatpush.msra.mxu0 0.0
      %333 = vmatpush.msra.mxu0 0.0
      %334 = vmatpush.msra.mxu0 0.0
      %335 = vmatpush.msra.mxu0 0.0
      %336 = vmatpush.msra.mxu0 0.0
      %337 = vmatpush.msra.mxu0 %v274
      %338 = vmatpush.msra.mxu0 %v273
      %339 = vmatpush.msra.mxu0 %v272
      %340 = vmatpush.msra.mxu0 %v271
      %341 = vmatpush.msra.mxu0 %v270
      %342 = vmatpush.msra.mxu0 %v269
      %343 = vmatpush.msra.mxu0 %v268
      %344 = vmatpush.msra.mxu0 %v267
      %345 = vmatpush.msra.mxu0 %v266
      %346 = vmatmul.f32.gmra.mxu0 %v313
      %v347 = vpop.f32.mrf.mxu0
      %v348 = vadd.f32 %v284, %v347
      %349 = vmatmul.f32.gmra.mxu0 %v316
      %v350 = vpop.f32.mrf.mxu0
      %v351 = vadd.f32 %v289, %v350
      %352 = vmatmul.f32.gmra.mxu0 %v319
      %v353 = vpop.f32.mrf.mxu0
      %v354 = vadd.f32 %v294, %v353
      %355 = vmatmul.f32.gmra.mxu0 %v322
      %v356 = vpop.f32.mrf.mxu0
      %v357 = vadd.f32 %v299, %v356
      %358 = vmatmul.f32.gmra.mxu0 %v325
      %v359 = vpop.f32.mrf.mxu0
      %v360 = vadd.f32 %v304, %v359
      %361 = vmatmul.f32.gmra.mxu0 %v328
      %v362 = vpop.f32.mrf.mxu0
      %v363 = vadd.f32 %v309, %v362
      %364 = vdwg.mxu0
      %v365 = vmax.f32 %v348, 0.0
      %v366 = vmax.f32 %v351, 0.0
      %v367 = vmax.f32 %v354, 0.0
      %v368 = vmax.f32 %v357, 0.0
      %v369 = vmax.f32 %v360, 0.0
      %v370 = vmax.f32 %v363, 0.0
      %371 = vst [vmem:[%s190] sm:$0xff] %v365
      %372 = vst [vmem:[%s190 + $0x8] sm:$0xff] %v366
      %373 = vst [vmem:[%s190 + $0x10] sm:$0xff] %v367
      %374 = vst [vmem:[%s190 + $0x18] sm:$0xff] %v368
      %375 = vst [vmem:[%s190 + $0x20] sm:$0xff] %v369
      %376 = vst [vmem:[%s190 + $0x28] sm:$0xff] %v370
      %p377 = scmp.lt.s32.totalorder %s18, 1
      %s378 = scalar_select %p377, %s18, 1
      %p379 = scmp.lt.s32.totalorder %s19, 0
      %s380 = scalar_select %p379, %s19, 0
      %s381 = smul.addr %s378, 6
      %s382 = sadd.s32 %s380, %s381
      %s383 = smul.addr %s382, 8
      %s384 = scalar_lea.vmem %s3, %s383
      // Predicated region
      $region33: #{resi_decoder_forward.4} parent=31 // pred_check
        %p385 = pneg %p114
      $region34: #{resi_decoder_forward.4} parent=31 // pred_check_branch
        %387 = sbr.rel (%p385) target = $region36
      $region35: #{resi_decoder_forward.4} parent=31 // pred_region
        _
      $region36: #{resi_decoder_forward.4} parent=31 // pred_fallthru
        _
    $region32: #{resi_decoder_forward.4} parent=5 // pred_fallthru
      _
    %p388 = scmp.le.s32.totalorder 2, %s9
    // Predicated region
    $region37: #{resi_decoder_forward.4} parent=5 // pred_check
      %p389 = pneg %p388
    $region38: #{resi_decoder_forward.4} parent=5 // pred_check_branch
      %391 = sbr.rel (%p389) target = $region40
    $region39: #{resi_decoder_forward.4} parent=5 // pred_region
      %s392 = ssub.s32 %s9, 2
      // Predicated region
      $region41: #{resi_decoder_forward.4} parent=39 // pred_check
        %p393 = pneg %p120
      $region42: #{resi_decoder_forward.4} parent=39 // pred_check_branch
        %395 = sbr.rel (%p393) target = $region44
      $region43: #{resi_decoder_forward.4} parent=39 // pred_region
        %p396 = scmp.lt.s32.totalorder %s20, 1
        %s397 = scalar_select %p396, %s20, 1
        %p398 = scmp.lt.s32.totalorder %s21, 0
        %s399 = scalar_select %p398, %s21, 0
        %s400 = smul.addr %s397, 6
        %s401 = sadd.s32 %s399, %s400
        %s402 = smul.addr %s401, 8
        %s403 = scalar_lea.vmem %s3, %s402
      $region44: #{resi_decoder_forward.4} parent=39 // pred_fallthru
        _
    $region40: #{resi_decoder_forward.4} parent=5 // pred_fallthru
      _
  $region6: #{resi_decoder_forward.4} parent=0 // loop_footer
    %s13 = sadd.s32 1, %s9
  $region7: #{resi_decoder_forward.4} parent=0 // loop_footer_branch
    %8 = sbr.rel target = $region3
  $region8: #{resi_decoder_forward.4} parent=0 // loop_exit
    _

// kernel: resi_decoder_forward.5
$region0: #{resi_decoder_forward.5}
  #allocation0 [shape = 'u32[]', space=smem, size = 0x4, offset = 0x4, fixed_abs, tag = 'smem constant byte address 0x4 - core index']
  #allocation1 [shape = 'u32[72,128]{1,0:T(1,128)}', space=vmem, size = 0x9000, scoped, tag = 'internal scratch']
  #allocation2 [shape = 'f32[144,384]{1,0:T(8,128)}', space=vmem, size = 0x36000, scoped, tag = 'scratch operand']
  %s0 = inlined_call_operand.vmem [shape: f32[2,16,512], index: 0, kind: input, shape index: {}]
  %s1 = inlined_call_operand.vmem [shape: f32[8,144], index: 1, kind: input, shape index: {}]
  %s2 = inlined_call_operand.vmem [shape: f32[8,1], index: 2, kind: input, shape index: {}]
  %s3 = inlined_call_operand.vmem [shape: f32[2,8,384], index: 3, kind: output, shape index: {}]
  %s4 = sld [smem:[#allocation0]]
  $region45: #{resi_decoder_forward.5} parent=0
    _
  %s6 = ssub.s32 1, %s4
  %s7 = scalar_select 0, %s6, %s4
  loop: start=0, step=1, limit=4
  $region2: #{resi_decoder_forward.5} parent=0 // loop_pre_header
    _
  $region3: #{resi_decoder_forward.5} parent=0 // loop_header
    %s9 = sphi 0, %s13
    %p10 = scmp.ge.s32.totalorder %s9, 4
    %s16 = sphi 0, %s28
    %s17 = sphi 0, %s24
    %s18 = sphi 0, %s16
    %s19 = sphi 0, %s17
    %s20 = sphi 0, %s18
    %s21 = sphi 0, %s19
    %s31 = sphi 0, %s33
    %s34 = sphi 0, %s31
    %s35 = sphi 0, %s34
    %s51 = sphi 0, %s35
    %s55 = sphi 0, %s55
    %s57 = sphi 0, %s55
    %s58 = sphi 0, %s57
    %s72 = sphi 0, %s58
    %s76 = sphi 0, %s76
    %s78 = sphi 0, %s76
    %s79 = sphi 0, %s78
    %s93 = sphi 0, %s79
    %s101 = sphi 0, %s103
    %s104 = sphi 0, %s101
    %s105 = sphi 0, %s104
    %s121 = sphi 0, %s105
  $region4: #{resi_decoder_forward.5} parent=0 // loop_header_branch
    %12 = sbr.rel (%p10) target = $region8
  $region5: #{resi_decoder_forward.5} parent=0 // loop_body
    %s14 = ssub.s32 %s9, 1
    %s15 = ssub.s32 %s9, 2
    %s22 = sadd.s32 1, %s17
    %p23 = scmp.ge.s32.totalorder %s22, 1
    %s24 = scalar_select %p23, 0, %s22
    %s25 = sadd.s32 1, %s16
    %s26 = scalar_select %p23, %s25, %s16
    %p27 = scmp.ge.s32.totalorder %s26, 2
    %s28 = scalar_select %p27, 0, %s26
    %s29 = ssub.s32 %s16, %s28
    %p30 = scmp.eq.s32.totalorder %s29, 0
    %s32 = sadd.s32 %s31, 1
    %s33 = scalar_select %p30, %s31, %s32
    %p36 = pneg %p30
    %p37 = scmp.eq.s32.totalorder %s9, 1
    %p38 = por %p36, %p37
    %p39 = scmp.ne.s32.totalorder %s31, %s34
    %p40 = scmp.eq.s32.totalorder %s9, 0
    %p41 = por %p39, %p40
    %p42 = scmp.ne.s32.totalorder %s31, %s34
    %p43 = scmp.eq.s32.totalorder %s14, 1
    %p44 = por %p42, %p43
    %p45 = scmp.ne.s32.totalorder %s34, %s35
    %p46 = scmp.eq.s32.totalorder %s14, 0
    %p47 = por %p45, %p46
    %p48 = scmp.ne.s32.totalorder %s34, %s35
    %p49 = scmp.eq.s32.totalorder %s15, 1
    %p50 = por %p48, %p49
    %p52 = scmp.ne.s32.totalorder %s35, %s51
    %p53 = scmp.eq.s32.totalorder %s15, 0
    %p54 = por %p52, %p53
    %s56 = sadd.s32 %s55, 1
    %p59 = scmp.eq.s32.totalorder %s9, 1
    %p60 = scmp.ne.s32.totalorder %s55, %s57
    %p61 = scmp.eq.s32.totalorder %s9, 0
    %p62 = por %p60, %p61
    %p63 = scmp.ne.s32.totalorder %s55, %s57
    %p64 = scmp.eq.s32.totalorder %s14, 1
    %p65 = por %p63, %p64
    %p66 = scmp.ne.s32.totalorder %s57, %s58
    %p67 = scmp.eq.s32.totalorder %s14, 0
    %p68 = por %p66, %p67
    %p69 = scmp.ne.s32.totalorder %s57, %s58
    %p70 = scmp.eq.s32.totalorder %s15, 1
    %p71 = por %p69, %p70
    %p73 = scmp.ne.s32.totalorder %s58, %s72
    %p74 = scmp.eq.s32.totalorder %s15, 0
    %p75 = por %p73, %p74
    %s77 = sadd.s32 %s76, 1
    %p80 = scmp.eq.s32.totalorder %s9, 1
    %p81 = scmp.ne.s32.totalorder %s76, %s78
    %p82 = scmp.eq.s32.totalorder %s9, 0
    %p83 = por %p81, %p82
    %p84 = scmp.ne.s32.totalorder %s76, %s78
    %p85 = scmp.eq.s32.totalorder %s14, 1
    %p86 = por %p84, %p85
    %p87 = scmp.ne.s32.totalorder %s78, %s79
    %p88 = scmp.eq.s32.totalorder %s14, 0
    %p89 = por %p87, %p88
    %p90 = scmp.ne.s32.totalorder %s78, %s79
    %p91 = scmp.eq.s32.totalorder %s15, 1
    %p92 = por %p90, %p91
    %p94 = scmp.ne.s32.totalorder %s79, %s93
    %p95 = scmp.eq.s32.totalorder %s15, 0
    %p96 = por %p94, %p95
    %s97 = ssub.s32 %s16, %s28
    %s98 = ssub.s32 %s17, %s24
    %s99 = sor.u32 %s97, %s98
    %p100 = scmp.eq.s32.totalorder %s99, 0
    %s102 = sadd.s32 %s101, 1
    %s103 = scalar_select %p100, %s101, %s102
    %p106 = pneg %p100
    %p107 = scmp.eq.s32.totalorder %s9, 1
    %p108 = por %p106, %p107
    %p109 = scmp.ne.s32.totalorder %s101, %s104
    %p110 = scmp.eq.s32.totalorder %s9, 0
    %p111 = por %p109, %p110
    %p112 = scmp.ne.s32.totalorder %s101, %s104
    %p113 = scmp.eq.s32.totalorder %s14, 1
    %p114 = por %p112, %p113
    %p115 = scmp.ne.s32.totalorder %s104, %s105
    %p116 = scmp.eq.s32.totalorder %s14, 0
    %p117 = por %p115, %p116
    %p118 = scmp.ne.s32.totalorder %s104, %s105
    %p119 = scmp.eq.s32.totalorder %s15, 1
    %p120 = por %p118, %p119
    %p122 = scmp.ne.s32.totalorder %s105, %s121
    %p123 = scmp.eq.s32.totalorder %s15, 0
    %p124 = por %p122, %p123
    %p125 = scmp.le.s32.totalorder 1, %s9
    %p126 = scmp.lt.s32.totalorder %s9, 3
    %p127 = pnand %p125, %p126
    %p128 = pneg %p127
    // Predicated region
    $region9: #{resi_decoder_forward.5} parent=5 // pred_check
      _
    $region10: #{resi_decoder_forward.5} parent=5 // pred_check_branch
      %130 = sbr.rel (%p127) target = $region12
    $region11: #{resi_decoder_forward.5} parent=5 // pred_region
      %s131 = ssub.s32 %s9, 1
      // Predicated region
      $region13: #{resi_decoder_forward.5} parent=11 // pred_check
        %p132 = pneg %p68
      $region14: #{resi_decoder_forward.5} parent=11 // pred_check_branch
        %134 = sbr.rel (%p132) target = $region16
      $region15: #{resi_decoder_forward.5} parent=11 // pred_region
        _
      $region16: #{resi_decoder_forward.5} parent=11 // pred_fallthru
        _
      // Predicated region
      $region17: #{resi_decoder_forward.5} parent=11 // pred_check
        %p135 = pneg %p89
      $region18: #{resi_decoder_forward.5} parent=11 // pred_check_branch
        %137 = sbr.rel (%p135) target = $region20
      $region19: #{resi_decoder_forward.5} parent=11 // pred_region
        _
      $region20: #{resi_decoder_forward.5} parent=11 // pred_fallthru
        _
    $region12: #{resi_decoder_forward.5} parent=5 // pred_fallthru
      _
    %p138 = scmp.lt.s32.totalorder %s9, 2
    // Predicated region
    $region21: #{resi_decoder_forward.5} parent=5 // pred_check
      %p139 = pneg %p138
    $region22: #{resi_decoder_forward.5} parent=5 // pred_check_branch
      %141 = sbr.rel (%p139) target = $region24
    $region23: #{resi_decoder_forward.5} parent=5 // pred_region
      // Predicated region
      $region25: #{resi_decoder_forward.5} parent=23 // pred_check
        %p142 = pneg %p41
      $region26: #{resi_decoder_forward.5} parent=23 // pred_check_branch
        %144 = sbr.rel (%p142) target = $region28
      $region27: #{resi_decoder_forward.5} parent=23 // pred_region
        %p145 = scmp.lt.s32.totalorder %s16, 1
        %s146 = scalar_select %p145, %s16, 1
        %s147 = smul.addr %s146, 8
        %s148 = smul.addr %s147, 8
        %s149 = scalar_lea.vmem %s0, %s148
      $region28: #{resi_decoder_forward.5} parent=23 // pred_fallthru
        _
    $region24: #{resi_decoder_forward.5} parent=5 // pred_fallthru
      _
    %p150 = scmp.le.s32.totalorder 1, %s9
    %p151 = scmp.lt.s32.totalorder %s9, 3
    %p152 = pnand %p150, %p151
    %p153 = pneg %p152
    // Predicated region
    $region29: #{resi_decoder_forward.5} parent=5 // pred_check
      _
    $region30: #{resi_decoder_forward.5} parent=5 // pred_check_branch
      %155 = sbr.rel (%p152) target = $region32
    $region31: #{resi_decoder_forward.5} parent=5 // pred_region
      %s156 = ssub.s32 %s9, 1
      %p157 = scmp.lt.s32.totalorder %s18, 1
      %s158 = scalar_select %p157, %s18, 1
      %s159 = smul.addr %s158, 8
      %s160 = smul.addr %s159, 8
      %s161 = scalar_lea.vmem %s0, %s160
      %p162 = pneg %p47
      %p163 = pneg %p44
      %p164 = pneg %p68
      %p165 = pneg %p65
      %p166 = pneg %p89
      %p167 = pneg %p86
      %p168 = pneg %p117
      %p169 = pneg %p114
      %s170 = smul.u32 3, %s19
      %p171 = scmp.lt.s32.totalorder %s18, 1
      %s172 = scalar_select %p171, %s18, 1
      %p173 = scmp.lt.s32.totalorder %s170, 2
      %s174 = scalar_select %p173, %s170, 2
      %s175 = smul.addr %s172, 3
      %s176 = sadd.s32 %s174, %s175
      %s177 = smul.addr %s176, 8
      %s178 = scalar_lea.vmem %s3, %s177
      %p179 = scmp.lt.s32.totalorder %s18, 1
      %s180 = scalar_select %p179, %s18, 1
      %s181 = smul.addr %s180, 8
      %s182 = smul.addr %s181, 8
      %s183 = scalar_lea.vmem %s0, %s182
      %s184 = smul.u32 3, %s19
      %p185 = scmp.lt.s32.totalorder %s18, 1
      %s186 = scalar_select %p185, %s18, 1
      %p187 = scmp.lt.s32.totalorder %s184, 2
      %s188 = scalar_select %p187, %s184, 2
      %s189 = smul.addr %s186, 3
      %s190 = sadd.s32 %s188, %s189
      %s191 = smul.addr %s190, 8
      %s192 = scalar_lea.vmem %s3, %s191
      %s193 = smul.u32 3, %s19
      %v194 = vld [vmem:[%s183] sm:$0xff]
      %v195 = vld [vmem:[%s183 + $0x8] sm:$0xff]
      %v196 = vld [vmem:[%s183 + $0x10] sm:$0xff]
      %v197 = vld [vmem:[%s183 + $0x18] sm:$0xff]
      %v198 = vld [vmem:[%s183 + $0x20] sm:$0xff]
      %v199 = vld [vmem:[%s183 + $0x28] sm:$0xff]
      %v200 = vld [vmem:[%s183 + $0x30] sm:$0xff]
      %v201 = vld [vmem:[%s183 + $0x38] sm:$0xff]
      %202 = vst [vmem:[#allocation2] sm:$0xff] %v194
      %203 = vst [vmem:[#allocation2 + $0x8] sm:$0xff] %v195
      %204 = vst [vmem:[#allocation2 + $0x10] sm:$0xff] %v196
      %205 = vst [vmem:[#allocation2 + $0x18] sm:$0xff] %v198
      %206 = vst [vmem:[#allocation2 + $0x20] sm:$0xff] %v199
      %207 = vst [vmem:[#allocation2 + $0x28] sm:$0xff] %v200
      %216 = vrot.lane.b32.xlu0 %v194, 127
      %v217 = vpop.permute.xlu0 %216
      %218 = vrot.lane.b32.xlu0 %v195, 127
      %v219 = vpop.permute.xlu0 %218
      %220 = vrot.lane.b32.xlu0 %v196, 127
      %v221 = vpop.permute.xlu0 %220
      %222 = vrot.lane.b32.xlu0 %v197, 127
      %v223 = vpop.permute.xlu0 %222
      %224 = vrot.lane.b32.xlu0 %v198, 127
      %v225 = vpop.permute.xlu0 %224
      %226 = vrot.lane.b32.xlu0 %v199, 127
      %v227 = vpop.permute.xlu0 %226
      %228 = vrot.lane.b32.xlu0 %v200, 127
      %v229 = vpop.permute.xlu0 %228
      %230 = vrot.lane.b32.xlu0 %v201, 127
      %v231 = vpop.permute.xlu0 %230
      %vm232 = vcmask 1039360
      %v233 = vsel %vm232, %v217, %v219
      %v234 = vsel %vm232, %v219, %v221
      %v235 = vsel %vm232, %v221, %v223
      %v236 = vsel %vm232, %v225, %v227
      %v237 = vsel %vm232, %v227, %v229
      %v238 = vsel %vm232, %v229, %v231
      %245 = vst [vmem:[#allocation2 + $0x30] sm:$0xff] %v233
      %246 = vst [vmem:[#allocation2 + $0x38] sm:$0xff] %v234
      %247 = vst [vmem:[#allocation2 + $0x40] sm:$0xff] %v235
      %248 = vst [vmem:[#allocation2 + $0x48] sm:$0xff] %v236
      %249 = vst [vmem:[#allocation2 + $0x50] sm:$0xff] %v237
      %250 = vst [vmem:[#allocation2 + $0x58] sm:$0xff] %v238
      %251 = vrot.lane.b32.xlu0 %v194, 126
      %v252 = vpop.permute.xlu0 %251
      %253 = vrot.lane.b32.xlu0 %v195, 126
      %v254 = vpop.permute.xlu0 %253
      %255 = vrot.lane.b32.xlu0 %v196, 126
      %v256 = vpop.permute.xlu0 %255
      %257 = vrot.lane.b32.xlu0 %v197, 126
      %v258 = vpop.permute.xlu0 %257
      %259 = vrot.lane.b32.xlu0 %v198, 126
      %v260 = vpop.permute.xlu0 %259
      %261 = vrot.lane.b32.xlu0 %v199, 126
      %v262 = vpop.permute.xlu0 %261
      %263 = vrot.lane.b32.xlu0 %v200, 126
      %v264 = vpop.permute.xlu0 %263
      %265 = vrot.lane.b32.xlu0 %v201, 126
      %v266 = vpop.permute.xlu0 %265
      %vm267 = vcmask 1031168
      %v268 = vsel %vm267, %v252, %v254
      %v269 = vsel %vm267, %v254, %v256
      %v270 = vsel %vm267, %v256, %v258
      %v271 = vsel %vm267, %v260, %v262
      %v272 = vsel %vm267, %v262, %v264
      %v273 = vsel %vm267, %v264, %v266
      %280 = vst [vmem:[#allocation2 + $0x60] sm:$0xff] %v268
      %281 = vst [vmem:[#allocation2 + $0x68] sm:$0xff] %v269
      %282 = vst [vmem:[#allocation2 + $0x70] sm:$0xff] %v270
      %283 = vst [vmem:[#allocation2 + $0x78] sm:$0xff] %v271
      %284 = vst [vmem:[#allocation2 + $0x80] sm:$0xff] %v272
      %285 = vst [vmem:[#allocation2 + $0x88] sm:$0xff] %v273
      %286 = vrot.lane.b32.xlu0 %v194, 110
      %v287 = vpop.permute.xlu0 %286
      %288 = vrot.lane.b32.xlu0 %v195, 110
      %v289 = vpop.permute.xlu0 %288
      %290 = vrot.lane.b32.xlu0 %v196, 110
      %v291 = vpop.permute.xlu0 %290
      %292 = vrot.lane.b32.xlu0 %v197, 110
      %v293 = vpop.permute.xlu0 %292
      %294 = vrot.lane.b32.xlu0 %v198, 110
      %v295 = vpop.permute.xlu0 %294
      %296 = vrot.lane.b32.xlu0 %v199, 110
      %v297 = vpop.permute.xlu0 %296
      %298 = vrot.lane.b32.xlu0 %v200, 110
      %v299 = vpop.permute.xlu0 %298
      %300 = vrot.lane.b32.xlu0 %v201, 110
      %v301 = vpop.permute.xlu0 %300
      %vm302 = vcmask 900096
      %v303 = vsel %vm302, %v287, %v289
      %v304 = vsel %vm302, %v289, %v291
      %v305 = vsel %vm302, %v291, %v293
      %v306 = vsel %vm302, %v295, %v297
      %v307 = vsel %vm302, %v297, %v299
      %v308 = vsel %vm302, %v299, %v301
      %315 = vst [vmem:[#allocation2 + $0x90] sm:$0xff] %v303
      %316 = vst [vmem:[#allocation2 + $0x98] sm:$0xff] %v304
      %317 = vst [vmem:[#allocation2 + $0xa0] sm:$0xff] %v305
      %318 = vst [vmem:[#allocation2 + $0xa8] sm:$0xff] %v306
      %319 = vst [vmem:[#allocation2 + $0xb0] sm:$0xff] %v307
      %320 = vst [vmem:[#allocation2 + $0xb8] sm:$0xff] %v308
      %321 = vrot.lane.b32.xlu0 %v194, 109
      %v322 = vpop.permute.xlu0 %321
      %323 = vrot.lane.b32.xlu0 %v195, 109
      %v324 = vpop.permute.xlu0 %323
      %325 = vrot.lane.b32.xlu0 %v196, 109
      %v326 = vpop.permute.xlu0 %325
      %327 = vrot.lane.b32.xlu0 %v197, 109
      %v328 = vpop.permute.xlu0 %327
      %329 = vrot.lane.b32.xlu0 %v198, 109
      %v330 = vpop.permute.xlu0 %329
      %331 = vrot.lane.b32.xlu0 %v199, 109
      %v332 = vpop.permute.xlu0 %331
      %333 = vrot.lane.b32.xlu0 %v200, 109
      %v334 = vpop.permute.xlu0 %333
      %335 = vrot.lane.b32.xlu0 %v201, 109
      %v336 = vpop.permute.xlu0 %335
      %vm337 = vcmask 891904
      %v338 = vsel %vm337, %v322, %v324
      %v339 = vsel %vm337, %v324, %v326
      %v340 = vsel %vm337, %v326, %v328
      %v341 = vsel %vm337, %v330, %v332
      %v342 = vsel %vm337, %v332, %v334
      %v343 = vsel %vm337, %v334, %v336
      %350 = vst [vmem:[#allocation2 + $0xc0] sm:$0xff] %v338
      %351 = vst [vmem:[#allocation2 + $0xc8] sm:$0xff] %v339
      %352 = vst [vmem:[#allocation2 + $0xd0] sm:$0xff] %v340
      %353 = vst [vmem:[#allocation2 + $0xd8] sm:$0xff] %v341
      %354 = vst [vmem:[#allocation2 + $0xe0] sm:$0xff] %v342
      %355 = vst [vmem:[#allocation2 + $0xe8] sm:$0xff] %v343
      %356 = vrot.lane.b32.xlu0 %v194, 108
      %v357 = vpop.permute.xlu0 %356
      %358 = vrot.lane.b32.xlu0 %v195, 108
      %v359 = vpop.permute.xlu0 %358
      %360 = vrot.lane.b32.xlu0 %v196, 108
      %v361 = vpop.permute.xlu0 %360
      %362 = vrot.lane.b32.xlu0 %v197, 108
      %v363 = vpop.permute.xlu0 %362
      %364 = vrot.lane.b32.xlu0 %v198, 108
      %v365 = vpop.permute.xlu0 %364
      %366 = vrot.lane.b32.xlu0 %v199, 108
      %v367 = vpop.permute.xlu0 %366
      %368 = vrot.lane.b32.xlu0 %v200, 108
      %v369 = vpop.permute.xlu0 %368
      %370 = vrot.lane.b32.xlu0 %v201, 108
      %v371 = vpop.permute.xlu0 %370
      %vm372 = vcmask 883712
      %v373 = vsel %vm372, %v357, %v359
      %v374 = vsel %vm372, %v359, %v361
      %v375 = vsel %vm372, %v361, %v363
      %v376 = vsel %vm372, %v365, %v367
      %v377 = vsel %vm372, %v367, %v369
      %v378 = vsel %vm372, %v369, %v371
      %385 = vst [vmem:[#allocation2 + $0xf0] sm:$0xff] %v373
      %386 = vst [vmem:[#allocation2 + $0xf8] sm:$0xff] %v374
      %387 = vst [vmem:[#allocation2 + $0x100] sm:$0xff] %v375
      %388 = vst [vmem:[#allocation2 + $0x108] sm:$0xff] %v376
      %389 = vst [vmem:[#allocation2 + $0x110] sm:$0xff] %v377
      %390 = vst [vmem:[#allocation2 + $0x118] sm:$0xff] %v378
      %391 = vrot.lane.b32.xlu0 %v194, 92
      %v392 = vpop.permute.xlu0 %391
      %393 = vrot.lane.b32.xlu0 %v195, 92
      %v394 = vpop.permute.xlu0 %393
      %395 = vrot.lane.b32.xlu0 %v196, 92
      %v396 = vpop.permute.xlu0 %395
      %397 = vrot.lane.b32.xlu0 %v197, 92
      %v398 = vpop.permute.xlu0 %397
      %399 = vrot.lane.b32.xlu0 %v198, 92
      %v400 = vpop.permute.xlu0 %399
      %401 = vrot.lane.b32.xlu0 %v199, 92
      %v402 = vpop.permute.xlu0 %401
      %403 = vrot.lane.b32.xlu0 %v200, 92
      %v404 = vpop.permute.xlu0 %403
      %405 = vrot.lane.b32.xlu0 %v201, 92
      %v406 = vpop.permute.xlu0 %405
      %vm407 = vcmask 752640
      %v408 = vsel %vm407, %v392, %v394
      %v409 = vsel %vm407, %v394, %v396
      %v410 = vsel %vm407, %v396, %v398
      %v411 = vsel %vm407, %v400, %v402
      %v412 = vsel %vm407, %v402, %v404
      %v413 = vsel %vm407, %v404, %v406
      %420 = vst [vmem:[#allocation2 + $0x120] sm:$0xff] %v408
      %421 = vst [vmem:[#allocation2 + $0x128] sm:$0xff] %v409
      %422 = vst [vmem:[#allocation2 + $0x130] sm:$0xff] %v410
      %423 = vst [vmem:[#allocation2 + $0x138] sm:$0xff] %v411
      %424 = vst [vmem:[#allocation2 + $0x140] sm:$0xff] %v412
      %425 = vst [vmem:[#allocation2 + $0x148] sm:$0xff] %v413
      %426 = vrot.lane.b32.xlu0 %v194, 91
      %v427 = vpop.permute.xlu0 %426
      %428 = vrot.lane.b32.xlu0 %v195, 91
      %v429 = vpop.permute.xlu0 %428
      %430 = vrot.lane.b32.xlu0 %v196, 91
      %v431 = vpop.permute.xlu0 %430
      %432 = vrot.lane.b32.xlu0 %v197, 91
      %v433 = vpop.permute.xlu0 %432
      %434 = vrot.lane.b32.xlu0 %v198, 91
      %v435 = vpop.permute.xlu0 %434
      %436 = vrot.lane.b32.xlu0 %v199, 91
      %v437 = vpop.permute.xlu0 %436
      %438 = vrot.lane.b32.xlu0 %v200, 91
      %v439 = vpop.permute.xlu0 %438
      %440 = vrot.lane.b32.xlu0 %v201, 91
      %v441 = vpop.permute.xlu0 %440
      %vm442 = vcmask 744448
      %v443 = vsel %vm442, %v427, %v429
      %v444 = vsel %vm442, %v429, %v431
      %v445 = vsel %vm442, %v431, %v433
      %v446 = vsel %vm442, %v435, %v437
      %v447 = vsel %vm442, %v437, %v439
      %v448 = vsel %vm442, %v439, %v441
      %455 = vst [vmem:[#allocation2 + $0x150] sm:$0xff] %v443
      %456 = vst [vmem:[#allocation2 + $0x158] sm:$0xff] %v444
      %457 = vst [vmem:[#allocation2 + $0x160] sm:$0xff] %v445
      %458 = vst [vmem:[#allocation2 + $0x168] sm:$0xff] %v446
      %459 = vst [vmem:[#allocation2 + $0x170] sm:$0xff] %v447
      %460 = vst [vmem:[#allocation2 + $0x178] sm:$0xff] %v448
      %461 = vrot.lane.b32.xlu0 %v194, 90
      %v462 = vpop.permute.xlu0 %461
      %463 = vrot.lane.b32.xlu0 %v195, 90
      %v464 = vpop.permute.xlu0 %463
      %465 = vrot.lane.b32.xlu0 %v196, 90
      %v466 = vpop.permute.xlu0 %465
      %467 = vrot.lane.b32.xlu0 %v197, 90
      %v468 = vpop.permute.xlu0 %467
      %469 = vrot.lane.b32.xlu0 %v198, 90
      %v470 = vpop.permute.xlu0 %469
      %471 = vrot.lane.b32.xlu0 %v199, 90
      %v472 = vpop.permute.xlu0 %471
      %473 = vrot.lane.b32.xlu0 %v200, 90
      %v474 = vpop.permute.xlu0 %473
      %475 = vrot.lane.b32.xlu0 %v201, 90
      %v476 = vpop.permute.xlu0 %475
      %vm477 = vcmask 736256
      %v478 = vsel %vm477, %v462, %v464
      %v479 = vsel %vm477, %v464, %v466
      %v480 = vsel %vm477, %v466, %v468
      %v481 = vsel %vm477, %v470, %v472
      %v482 = vsel %vm477, %v472, %v474
      %v483 = vsel %vm477, %v474, %v476
      %490 = vst [vmem:[#allocation2 + $0x180] sm:$0xff] %v478
      %491 = vst [vmem:[#allocation2 + $0x188] sm:$0xff] %v479
      %492 = vst [vmem:[#allocation2 + $0x190] sm:$0xff] %v480
      %493 = vst [vmem:[#allocation2 + $0x198] sm:$0xff] %v481
      %494 = vst [vmem:[#allocation2 + $0x1a0] sm:$0xff] %v482
      %495 = vst [vmem:[#allocation2 + $0x1a8] sm:$0xff] %v483
      %v496 = vld [vmem:[%s1] sm:$0xff]
      %v497 = vld [vmem:[%s1 + $0x8] sm:$0xff]
      %v498 = vld [vmem:[#allocation2] sm:$0xff]
      %v499 = vld [vmem:[#allocation2 + $0x8] sm:$0xff]
      %v500 = vld [vmem:[#allocation2 + $0x10] sm:$0xff]
      %v501 = vld [vmem:[#allocation2 + $0x18] sm:$0xff]
      %v502 = vld [vmem:[#allocation2 + $0x20] sm:$0xff]
      %v503 = vld [vmem:[#allocation2 + $0x28] sm:$0xff]
      %v504 = vld [vmem:[#allocation2 + $0x30] sm:$0xff]
      %v505 = vld [vmem:[#allocation2 + $0x38] sm:$0xff]
      %v506 = vld [vmem:[#allocation2 + $0x40] sm:$0xff]
      %v507 = vld [vmem:[#allocation2 + $0x48] sm:$0xff]
      %v508 = vld [vmem:[#allocation2 + $0x50] sm:$0xff]
      %v509 = vld [vmem:[#allocation2 + $0x58] sm:$0xff]
      %v510 = vld [vmem:[#allocation2 + $0x60] sm:$0xff]
      %v511 = vld [vmem:[#allocation2 + $0x68] sm:$0xff]
      %v512 = vld [vmem:[#allocation2 + $0x70] sm:$0xff]
      %v513 = vld [vmem:[#allocation2 + $0x78] sm:$0xff]
      %v514 = vld [vmem:[#allocation2 + $0x80] sm:$0xff]
      %v515 = vld [vmem:[#allocation2 + $0x88] sm:$0xff]
      %v516 = vld [vmem:[#allocation2 + $0x90] sm:$0xff]
      %v517 = vld [vmem:[#allocation2 + $0x98] sm:$0xff]
      %v518 = vld [vmem:[#allocation2 + $0xa0] sm:$0xff]
      %v519 = vld [vmem:[#allocation2 + $0xa8] sm:$0xff]
      %v520 = vld [vmem:[#allocation2 + $0xb0] sm:$0xff]
      %v521 = vld [vmem:[#allocation2 + $0xb8] sm:$0xff]
      %v522 = vld [vmem:[#allocation2 + $0xc0] sm:$0xff]
      %v523 = vld [vmem:[#allocation2 + $0xc8] sm:$0xff]
      %v524 = vld [vmem:[#allocation2 + $0xd0] sm:$0xff]
      %v525 = vld [vmem:[#allocation2 + $0xd8] sm:$0xff]
      %v526 = vld [vmem:[#allocation2 + $0xe0] sm:$0xff]
      %v527 = vld [vmem:[#allocation2 + $0xe8] sm:$0xff]
      %v528 = vld [vmem:[#allocation2 + $0xf0] sm:$0xff]
      %v529 = vld [vmem:[#allocation2 + $0xf8] sm:$0xff]
      %v530 = vld [vmem:[#allocation2 + $0x100] sm:$0xff]
      %v531 = vld [vmem:[#allocation2 + $0x108] sm:$0xff]
      %v532 = vld [vmem:[#allocation2 + $0x110] sm:$0xff]
      %v533 = vld [vmem:[#allocation2 + $0x118] sm:$0xff]
      %v534 = vld [vmem:[#allocation2 + $0x120] sm:$0xff]
      %v535 = vld [vmem:[#allocation2 + $0x128] sm:$0xff]
      %v536 = vld [vmem:[#allocation2 + $0x130] sm:$0xff]
      %v537 = vld [vmem:[#allocation2 + $0x138] sm:$0xff]
      %v538 = vld [vmem:[#allocation2 + $0x140] sm:$0xff]
      %v539 = vld [vmem:[#allocation2 + $0x148] sm:$0xff]
      %v540 = vld [vmem:[#allocation2 + $0x150] sm:$0xff]
      %v541 = vld [vmem:[#allocation2 + $0x158] sm:$0xff]
      %v542 = vld [vmem:[#allocation2 + $0x160] sm:$0xff]
      %v543 = vld [vmem:[#allocation2 + $0x168] sm:$0xff]
      %v544 = vld [vmem:[#allocation2 + $0x170] sm:$0xff]
      %v545 = vld [vmem:[#allocation2 + $0x178] sm:$0xff]
      %v546 = vld [vmem:[#allocation2 + $0x180] sm:$0xff]
      %v547 = vld [vmem:[#allocation2 + $0x188] sm:$0xff]
      %v548 = vld [vmem:[#allocation2 + $0x190] sm:$0xff]
      %v549 = vld [vmem:[#allocation2 + $0x198] sm:$0xff]
      %v550 = vld [vmem:[#allocation2 + $0x1a0] sm:$0xff]
      %v551 = vld [vmem:[#allocation2 + $0x1a8] sm:$0xff]
      %v552 = vld [vmem:[%s2] sm:$0xff]
      %554 = vset.pattern.permute.xlu0 0
      %555 = vperm.xlu0 %554, %v552
      %v556 = vpop.permute.xlu0 %555
      %vm558 = vcmask 130048
      %v560 = vsel %vm558, %v497, 0
      %562 = vmatpush.msra.mxu0 %v543
      %563 = vmatpush.msra.mxu0 %v540
      %564 = vmatpush.msra.mxu0 %v537
      %565 = vmatpush.msra.mxu0 %v534
      %566 = vmatpush.msra.mxu0 %v531
      %567 = vmatpush.msra.mxu0 %v528
      %568 = vmatpush.msra.mxu0 %v525
      %569 = vmatpush.msra.mxu0 %v522
      %570 = vmatpush.msra.mxu0 %v519
      %571 = vmatpush.msra.mxu0 %v516
      %572 = vmatpush.msra.mxu0 %v513
      %573 = vmatpush.msra.mxu0 %v510
      %574 = vmatpush.msra.mxu0 %v507
      %575 = vmatpush.msra.mxu0 %v504
      %576 = vmatpush.msra.mxu0 %v501
      %577 = vmatpush.msra.mxu0 %v498
      %578 = vmatmul.f32.gmra.mxu0 %v496
      %v579 = vpop.f32.mrf.mxu0
      %v580 = vadd.f32 %v556, %v579
      %581 = vdwg.mxu0
      %582 = vmatpush.msra.mxu0 0.0
      %583 = vmatpush.msra.mxu0 0.0
      %584 = vmatpush.msra.mxu0 0.0
      %585 = vmatpush.msra.mxu0 0.0
      %586 = vmatpush.msra.mxu0 0.0
      %587 = vmatpush.msra.mxu0 0.0
      %588 = vmatpush.msra.mxu0 0.0
      %589 = vmatpush.msra.mxu0 0.0
      %590 = vmatpush.msra.mxu0 0.0
      %591 = vmatpush.msra.mxu0 0.0
      %592 = vmatpush.msra.mxu0 0.0
      %593 = vmatpush.msra.mxu0 0.0
      %594 = vmatpush.msra.mxu0 0.0
      %595 = vmatpush.msra.mxu0 0.0
      %596 = vmatpush.msra.mxu0 %v549
      %597 = vmatpush.msra.mxu0 %v546
      %598 = vmatmul.f32.gmra.mxu0 %v560
      %v599 = vpop.f32.mrf.mxu0
      %v600 = vadd.f32 %v580, %v599
      %601 = vdwg.mxu0
      %602 = vmatpush.msra.mxu0 %v544
      %603 = vmatpush.msra.mxu0 %v541
      %604 = vmatpush.msra.mxu0 %v538
      %605 = vmatpush.msra.mxu0 %v535
      %606 = vmatpush.msra.mxu0 %v532
      %607 = vmatpush.msra.mxu0 %v529
      %608 = vmatpush.msra.mxu0 %v526
      %609 = vmatpush.msra.mxu0 %v523
      %610 = vmatpush.msra.mxu0 %v520
      %611 = vmatpush.msra.mxu0 %v517
      %612 = vmatpush.msra.mxu0 %v514
      %613 = vmatpush.msra.mxu0 %v511
      %614 = vmatpush.msra.mxu0 %v508
      %615 = vmatpush.msra.mxu0 %v505
      %616 = vmatpush.msra.mxu0 %v502
      %617 = vmatpush.msra.mxu0 %v499
      %618 = vmatmul.f32.gmra.mxu0 %v496
      %v619 = vpop.f32.mrf.mxu0
      %v620 = vadd.f32 %v556, %v619
      %621 = vdwg.mxu0
      %622 = vmatpush.msra.mxu0 0.0
      %623 = vmatpush.msra.mxu0 0.0
      %624 = vmatpush.msra.mxu0 0.0
      %625 = vmatpush.msra.mxu0 0.0
      %626 = vmatpush.msra.mxu0 0.0
      %627 = vmatpush.msra.mxu0 0.0
      %628 = vmatpush.msra.mxu0 0.0
      %629 = vmatpush.msra.mxu0 0.0
      %630 = vmatpush.msra.mxu0 0.0
      %631 = vmatpush.msra.mxu0 0.0
      %632 = vmatpush.msra.mxu0 0.0
      %633 = vmatpush.msra.mxu0 0.0
      %634 = vmatpush.msra.mxu0 0.0
      %635 = vmatpush.msra.mxu0 0.0
      %636 = vmatpush.msra.mxu0 %v550
      %637 = vmatpush.msra.mxu0 %v547
      %638 = vmatmul.f32.gmra.mxu0 %v560
      %v639 = vpop.f32.mrf.mxu0
      %v640 = vadd.f32 %v620, %v639
      %641 = vdwg.mxu0
      %642 = vmatpush.msra.mxu0 %v545
      %643 = vmatpush.msra.mxu0 %v542
      %644 = vmatpush.msra.mxu0 %v539
      %645 = vmatpush.msra.mxu0 %v536
      %646 = vmatpush.msra.mxu0 %v533
      %647 = vmatpush.msra.mxu0 %v530
      %648 = vmatpush.msra.mxu0 %v527
      %649 = vmatpush.msra.mxu0 %v524
      %650 = vmatpush.msra.mxu0 %v521
      %651 = vmatpush.msra.mxu0 %v518
      %652 = vmatpush.msra.mxu0 %v515
      %653 = vmatpush.msra.mxu0 %v512
      %654 = vmatpush.msra.mxu0 %v509
      %655 = vmatpush.msra.mxu0 %v506
      %656 = vmatpush.msra.mxu0 %v503
      %657 = vmatpush.msra.mxu0 %v500
      %658 = vmatmul.f32.gmra.mxu0 %v496
      %v659 = vpop.f32.mrf.mxu0
      %v660 = vadd.f32 %v556, %v659
      %661 = vdwg.mxu0
      %662 = vmatpush.msra.mxu0 0.0
      %663 = vmatpush.msra.mxu0 0.0
      %664 = vmatpush.msra.mxu0 0.0
      %665 = vmatpush.msra.mxu0 0.0
      %666 = vmatpush.msra.mxu0 0.0
      %667 = vmatpush.msra.mxu0 0.0
      %668 = vmatpush.msra.mxu0 0.0
      %669 = vmatpush.msra.mxu0 0.0
      %670 = vmatpush.msra.mxu0 0.0
      %671 = vmatpush.msra.mxu0 0.0
      %672 = vmatpush.msra.mxu0 0.0
      %673 = vmatpush.msra.mxu0 0.0
      %674 = vmatpush.msra.mxu0 0.0
      %675 = vmatpush.msra.mxu0 0.0
      %676 = vmatpush.msra.mxu0 %v551
      %677 = vmatpush.msra.mxu0 %v548
      %678 = vmatmul.f32.gmra.mxu0 %v560
      %v679 = vpop.f32.mrf.mxu0
      %v680 = vadd.f32 %v660, %v679
      %681 = vdwg.mxu0
      %682 = vst [vmem:[%s192] sm:$0xff] %v600
      %683 = vst [vmem:[%s192 + $0x8] sm:$0xff] %v640
      %684 = vst [vmem:[%s192 + $0x10] sm:$0xff] %v680
      %s685 = smul.u32 3, %s19
      %p686 = scmp.lt.s32.totalorder %s18, 1
      %s687 = scalar_select %p686, %s18, 1
      %p688 = scmp.lt.s32.totalorder %s685, 2
      %s689 = scalar_select %p688, %s685, 2
      %s690 = smul.addr %s687, 3
      %s691 = sadd.s32 %s689, %s690
      %s692 = smul.addr %s691, 8
      %s693 = scalar_lea.vmem %s3, %s692
      // Predicated region
      $region33: #{resi_decoder_forward.5} parent=31 // pred_check
        %p694 = pneg %p114
      $region34: #{resi_decoder_forward.5} parent=31 // pred_check_branch
        %696 = sbr.rel (%p694) target = $region36
      $region35: #{resi_decoder_forward.5} parent=31 // pred_region
        %s697 = smul.u32 3, %s19
      $region36: #{resi_decoder_forward.5} parent=31 // pred_fallthru
        _
    $region32: #{resi_decoder_forward.5} parent=5 // pred_fallthru
      _
    %p698 = scmp.le.s32.totalorder 2, %s9
    // Predicated region
    $region37: #{resi_decoder_forward.5} parent=5 // pred_check
      %p699 = pneg %p698
    $region38: #{resi_decoder_forward.5} parent=5 // pred_check_branch
      %701 = sbr.rel (%p699) target = $region40
    $region39: #{resi_decoder_forward.5} parent=5 // pred_region
      %s702 = ssub.s32 %s9, 2
      // Predicated region
      $region41: #{resi_decoder_forward.5} parent=39 // pred_check
        %p703 = pneg %p120
      $region42: #{resi_decoder_forward.5} parent=39 // pred_check_branch
        %705 = sbr.rel (%p703) target = $region44
      $region43: #{resi_decoder_forward.5} parent=39 // pred_region
        %s706 = smul.u32 3, %s21
        %p707 = scmp.lt.s32.totalorder %s20, 1
        %s708 = scalar_select %p707, %s20, 1
        %p709 = scmp.lt.s32.totalorder %s706, 2
        %s710 = scalar_select %p709, %s706, 2
        %s711 = smul.addr %s708, 3
        %s712 = sadd.s32 %s710, %s711
        %s713 = smul.addr %s712, 8
        %s714 = scalar_lea.vmem %s3, %s713
      $region44: #{resi_decoder_forward.5} parent=39 // pred_fallthru
        _
    $region40: #{resi_decoder_forward.5} parent=5 // pred_fallthru
      _
  $region6: #{resi_decoder_forward.5} parent=0 // loop_footer
    %s13 = sadd.s32 1, %s9
  $region7: #{resi_decoder_forward.5} parent=0 // loop_footer_branch
    %8 = sbr.rel target = $region3
  $region8: #{resi_decoder_forward.5} parent=0 // loop_exit
    _

</llo_original>
